<compile_context>
chip_gen: v6e
topology: v6e:2x2x1
jax: 0.10.0
libtpu: 0.0.40
codegen_flags: <defaults>
</compile_context>

<pallas_src>
import functools
import math

import jax
import jax.numpy as jnp
from jax.experimental import pallas as pl
from jax.experimental.pallas import tpu as pltpu


# ----------------------------------------------------------------------------
# Fused MHA kernel: one batch tile (batch_block elements) per grid step.
#   x_ref    : (Bb, S, D)     input activations
#   wqkv_ref : (D, 3D)  bf16  packed/transposed qkv weight (cols = [Q | K | V])
#   bqkv_ref : (1, 3D)  f32   packed qkv bias
#   wout_ref : (D, D)   bf16  transposed output-projection weight
#   bout_ref : (1, D)   f32   output-projection bias
#   mask_ref : (S, S)   f32   additive attention mask (0 / -1e9)
#   o_ref    : (Bb, S, D)     output
# ----------------------------------------------------------------------------
def _mha_kernel(x_ref, wqkv_ref, bqkv_ref, wout_ref, bout_ref, mask_ref, o_ref,
                *, num_heads, head_dim):
    Bb, S, D = x_ref.shape                       # D == num_heads * head_dim
    M = Bb * S

    # QKV projection: batch folded into M, bf16 operands, f32 accumulation.
    x = x_ref[...].reshape(M, D).astype(jnp.bfloat16)
    qkv = jnp.dot(x, wqkv_ref[...],
                  preferred_element_type=jnp.float32) + bqkv_ref[...]   # (M, 3D)

    w_out = wout_ref[...]                                       # (D, D) bf16
    mask = jnp.broadcast_to(mask_ref[...].reshape(1, S, S), (Bb, S, S))
    scale = 1.0 / math.sqrt(head_dim)

    acc = jnp.zeros((M, D), jnp.float32)
    # TODO(synk): for long sequences tile K/V with an online-softmax (flash)
    # pipeline over an extra "arbitrary" grid axis and set an explicit
    # vmem_limit_bytes; at these sizes everything fits comfortably in VMEM.
    for h in range(num_heads):                   # static unroll, H is small
        lo = h * head_dim
        hi = lo + head_dim
        q = qkv[:, lo:hi].reshape(Bb, S, head_dim).astype(jnp.bfloat16)
        k = qkv[:, D + lo:D + hi].reshape(Bb, S, head_dim).astype(jnp.bfloat16)
        v = qkv[:, 2 * D + lo:2 * D + hi].reshape(Bb, S, head_dim).astype(jnp.bfloat16)

        # scores: (Bb, S, S), MXU with f32 accumulation, mask added in f32.
        s = jnp.einsum('bqd,bkd->bqk', q, k,
                       preferred_element_type=jnp.float32) * scale + mask

        # softmax over keys, all math in f32.
        m = jnp.max(s, axis=-1, keepdims=True)
        p = jnp.exp(s - m)
        l = jnp.sum(p, axis=-1, keepdims=True)
        attn = p * pl.reciprocal(l, approx=True)

        head_out = jnp.einsum('bqk,bkd->bqd', attn.astype(jnp.bfloat16), v,
                              preferred_element_type=jnp.float32)   # (Bb,S,hd)

        # Accumulate the output projection per head (sublane-aligned row slice
        # of W_out^T) -- no concat, no separate final matmul.
        acc = acc + jnp.dot(head_out.reshape(M, head_dim).astype(jnp.bfloat16),
                            w_out[lo:hi, :],
                            preferred_element_type=jnp.float32)

    out = acc + bout_ref[...]
    o_ref[...] = out.reshape(Bb, S, D).astype(o_ref.dtype)


# ----------------------------------------------------------------------------
# Wrapper: repacks PyTorch-layout weights and launches the kernel.
#   wqkv: (3D, D), bqkv: (3D,), wout: (D, D), bout: (D,)  -- nn.Linear layout
#   mask: (S, S) additive mask
# ----------------------------------------------------------------------------
def multi_head_attention(x, wqkv, bqkv, wout, bout, mask, num_heads,
                         batch_block=None):
    B, S, D = x.shape
    head_dim = D // num_heads

    # Fold batch into the matmul M dimension, but keep >= 2 "parallel" grid
    # steps when possible so both v7x TensorCores get work.
    if batch_block is None:
        batch_block = B // 2 if (B >= 2 and B % 2 == 0) else 1
    assert B % batch_block == 0
    num_tiles = B // batch_block

    # PyTorch layout after reshape/permute/chunk interleaves per head as
    # [q_h | k_h | v_h] blocks of width head_dim.  Repack the projection
    # columns so the kernel sees [Q(all heads) | K(all heads) | V(all heads)],
    # each a contiguous, lane-aligned, head-major D-wide block.
    perm = jnp.arange(3 * D).reshape(num_heads, 3, head_dim)
    perm = perm.transpose(1, 0, 2).reshape(-1)              # new_col -> old_col
    wqkv_t = wqkv.T[:, perm].astype(jnp.bfloat16)           # (D, 3D) bf16
    bqkv_p = bqkv[perm].reshape(1, 3 * D).astype(jnp.float32)
    wout_t = wout.T.astype(jnp.bfloat16)                    # (D, D) bf16
    bout_2d = bout.reshape(1, D).astype(jnp.float32)
    mask_f32 = mask.astype(jnp.float32)

    kernel = functools.partial(_mha_kernel,
                               num_heads=num_heads, head_dim=head_dim)

    grid_spec = pltpu.PrefetchScalarGridSpec(
        num_scalar_prefetch=0,
        grid=(num_tiles,),
        in_specs=[
            pl.BlockSpec((batch_block, S, D), lambda b: (b, 0, 0)),  # x
            pl.BlockSpec((D, 3 * D), lambda b: (0, 0)),              # W_qkv^T
            pl.BlockSpec((1, 3 * D), lambda b: (0, 0)),              # b_qkv
            pl.BlockSpec((D, D), lambda b: (0, 0)),                  # W_out^T
            pl.BlockSpec((1, D), lambda b: (0, 0)),                  # b_out
            pl.BlockSpec((S, S), lambda b: (0, 0)),                  # mask
        ],
        out_specs=pl.BlockSpec((batch_block, S, D), lambda b: (b, 0, 0)),
    )

    H, hd = num_heads, head_dim
    cost = pl.CostEstimate(
        flops=(2 * B * S * D * 3 * D          # qkv projection
               + 4 * B * H * S * S * hd       # scores + attn @ v
               + 2 * B * S * D * D),          # output projection
        transcendentals=B * H * S * S,        # exp
        bytes_accessed=(x.size * x.dtype.itemsize
                        + wqkv_t.size * 2 + wout_t.size * 2
                        + bqkv_p.size * 4 + bout_2d.size * 4
                        + mask_f32.size * 4
                        + B * S * D * x.dtype.itemsize),
    )

    return pl.pallas_call(
        kernel,
        out_shape=jax.ShapeDtypeStruct((B, S, D), x.dtype),
        grid_spec=grid_spec,
        compiler_params=pltpu.CompilerParams(
            dimension_semantics=("parallel",)),
        cost_estimate=cost,
    )(x, wqkv_t, bqkv_p, wout_t, bout_2d, mask_f32)


# ----------------------------------------------------------------------------
# Pure-JAX reference mirroring the PyTorch module exactly (for validation).
# ----------------------------------------------------------------------------
def mha_reference(x, wqkv, bqkv, wout, bout, mask, num_heads):
    B, S, D = x.shape
    hd = D // num_heads
    qkv = x @ wqkv.T + bqkv                                        # (B,S,3D)
    qkv = qkv.reshape(B, S, num_heads, 3 * hd).transpose(0, 2, 1, 3)
    q, k, v = jnp.split(qkv, 3, axis=-1)                           # (B,H,S,hd)
    scaled = jnp.einsum('bhqd,bhkd->bhqk', q, k) / math.sqrt(hd)
    scaled = scaled + mask                                         # (S,S) broadcast
    attn = jax.nn.softmax(scaled, axis=-1)
    values = jnp.einsum('bhqk,bhkd->bhqd', attn, v)
    values = values.transpose(0, 2, 1, 3).reshape(B, S, D)
    return values @ wout.T + bout


if __name__ == "__main__":
    B, S, D, H = 4, 16, 128, 4          # batch, seq, d_model, num_heads

    key = jax.random.PRNGKey(0)
    kx, kw1, kb1, kw2, kb2 = jax.random.split(key, 5)

    x = jax.random.normal(kx, (B, S, D), dtype=jnp.float32)

    # nn.Linear default init: U(-1/sqrt(fan_in), 1/sqrt(fan_in))
    lim = 1.0 / math.sqrt(D)
    wqkv = jax.random.uniform(kw1, (3 * D, D), jnp.float32, -lim, lim)
    bqkv = jax.random.uniform(kb1, (3 * D,), jnp.float32, -lim, lim)
    wout = jax.random.uniform(kw2, (D, D), jnp.float32, -lim, lim)
    bout = jax.random.uniform(kb2, (D,), jnp.float32, -lim, lim)

    # Causal additive mask (0 below/on diagonal, -1e9 above).
    causal = jnp.tril(jnp.ones((S, S), dtype=jnp.bool_))
    mask = jnp.where(causal, 0.0, -1e9).astype(jnp.float32)

    out = multi_head_attention(x, wqkv, bqkv, wout, bout, mask, H)
    out = jax.block_until_ready(out)

    ref = mha_reference(x, wqkv, bqkv, wout, bout, mask, H)
    assert out.shape == (B, S, D), out.shape
    assert out.dtype == x.dtype
    err = float(jnp.max(jnp.abs(out - ref)))
    # bf16 MXU operands with f32 accumulation: slightly looser than pure-f32.
    assert err < 5e-2, f"max abs error vs reference: {err}"

    print("KERNEL_OK")
</pallas_src>

<mosaic_0001>
module attributes {stable_mosaic.version = 11 : i64} {
  func.func @_mha_kernel(%arg0: i32, %arg1: memref<2x16x128xf32, #tpu.memory_space<vmem>>, %arg2: memref<128x384xbf16, #tpu.memory_space<vmem>>, %arg3: memref<1x384xf32, #tpu.memory_space<vmem>>, %arg4: memref<128x128xbf16, #tpu.memory_space<vmem>>, %arg5: memref<1x128xf32, #tpu.memory_space<vmem>>, %arg6: memref<16x16xf32, #tpu.memory_space<vmem>>, %arg7: memref<2x16x128xf32, #tpu.memory_space<vmem>>) attributes {dimension_semantics = [#tpu.dimension_semantics<parallel>], iteration_bounds = array<i64: 2>, scalar_prefetch = 0 : i64, scratch_operands = 0 : i64, tpu.core_type = #tpu.core_type<tc>, window_params = [{transform_indices = @transform_0, window_bounds = array<i64: 2, 16, 128>}, {pipeline_mode = #tpu.pipeline_mode<synchronous>, transform_indices = @transform_1, window_bounds = array<i64: 128, 384>}, {pipeline_mode = #tpu.pipeline_mode<synchronous>, transform_indices = @transform_2, window_bounds = array<i64: 1, 384>}, {pipeline_mode = #tpu.pipeline_mode<synchronous>, transform_indices = @transform_3, window_bounds = array<i64: 128, 128>}, {pipeline_mode = #tpu.pipeline_mode<synchronous>, transform_indices = @transform_4, window_bounds = array<i64: 1, 128>}, {pipeline_mode = #tpu.pipeline_mode<synchronous>, transform_indices = @transform_5, window_bounds = array<i64: 16, 16>}, {transform_indices = @transform_6, window_bounds = array<i64: 2, 16, 128>}]} {
    %c0 = arith.constant 0 : index
    %c0_0 = arith.constant 0 : index
    %c0_1 = arith.constant 0 : index
    %0 = vector.load %arg1[%c0, %c0_0, %c0_1] : memref<2x16x128xf32, #tpu.memory_space<vmem>>, vector<2x16x128xf32>
    %1 = vector.shape_cast %0 : vector<2x16x128xf32> to vector<32x128xf32>
    %2 = arith.truncf %1 : vector<32x128xf32> to vector<32x128xbf16>
    %c0_2 = arith.constant 0 : index
    %c0_3 = arith.constant 0 : index
    %3 = vector.load %arg2[%c0_2, %c0_3] : memref<128x384xbf16, #tpu.memory_space<vmem>>, vector<128x384xbf16>
    %cst = arith.constant dense<0.000000e+00> : vector<32x384xf32>
    %4 = tpu.matmul %2, %3, %cst {dimension_numbers = #tpu.dot_dimension_numbers<[1], [0], [0], [1], [0, 0, 1, 1], [], []>} : vector<32x128xbf16>, vector<128x384xbf16>, vector<32x384xf32> -> vector<32x384xf32>
    %c0_4 = arith.constant 0 : index
    %c0_5 = arith.constant 0 : index
    %5 = vector.load %arg3[%c0_4, %c0_5] : memref<1x384xf32, #tpu.memory_space<vmem>>, vector<1x384xf32>
    %6 = vector.broadcast %5 : vector<1x384xf32> to vector<32x384xf32>
    %7 = arith.addf %4, %6 : vector<32x384xf32>
    %c0_6 = arith.constant 0 : index
    %c0_7 = arith.constant 0 : index
    %8 = vector.load %arg4[%c0_6, %c0_7] : memref<128x128xbf16, #tpu.memory_space<vmem>>, vector<128x128xbf16>
    %c0_8 = arith.constant 0 : index
    %c0_9 = arith.constant 0 : index
    %9 = vector.load %arg6[%c0_8, %c0_9] : memref<16x16xf32, #tpu.memory_space<vmem>>, vector<16x16xf32>
    %10 = vector.shape_cast %9 : vector<16x16xf32> to vector<1x16x16xf32>
    %11 = vector.shape_cast %10 : vector<1x16x16xf32> to vector<1x16x16xf32>
    %12 = vector.broadcast %11 : vector<1x16x16xf32> to vector<2x16x16xf32>
    %cst_10 = arith.constant 0.000000e+00 : f32
    %13 = vector.broadcast %cst_10 : f32 to vector<32x128xf32>
    %14 = vector.extract_strided_slice %7 {offsets = [0, 0], sizes = [32, 32], strides = [1, 1]} : vector<32x384xf32> to vector<32x32xf32>
    %15 = vector.shape_cast %14 : vector<32x32xf32> to vector<2x16x32xf32>
    %16 = arith.truncf %15 : vector<2x16x32xf32> to vector<2x16x32xbf16>
    %17 = vector.extract_strided_slice %7 {offsets = [0, 128], sizes = [32, 32], strides = [1, 1]} : vector<32x384xf32> to vector<32x32xf32>
    %18 = vector.shape_cast %17 : vector<32x32xf32> to vector<2x16x32xf32>
    %19 = arith.truncf %18 : vector<2x16x32xf32> to vector<2x16x32xbf16>
    %20 = vector.extract_strided_slice %7 {offsets = [0, 256], sizes = [32, 32], strides = [1, 1]} : vector<32x384xf32> to vector<32x32xf32>
    %21 = vector.shape_cast %20 : vector<32x32xf32> to vector<2x16x32xf32>
    %22 = arith.truncf %21 : vector<2x16x32xf32> to vector<2x16x32xbf16>
    "tpu.trace_start"() <{level = 10 : i32, message = "bqd,bkd->bqk"}> : () -> ()
    %cst_11 = arith.constant dense<0.000000e+00> : vector<2x16x16xf32>
    %23 = tpu.matmul %16, %19, %cst_11 {dimension_numbers = #tpu.dot_dimension_numbers<[2], [2], [1], [1], [0, 0, 0, 1, 1, 1], [0], [0]>} : vector<2x16x32xbf16>, vector<2x16x32xbf16>, vector<2x16x16xf32> -> vector<2x16x16xf32>
    "tpu.trace_stop"() : () -> ()
    %cst_12 = arith.constant 0.176776692 : f32
    %24 = vector.broadcast %cst_12 : f32 to vector<2x16x16xf32>
    %25 = arith.mulf %23, %24 : vector<2x16x16xf32>
    %26 = arith.addf %25, %12 : vector<2x16x16xf32>
    %cst_13 = arith.constant dense<0xFF800000> : vector<2x16xf32>
    %27 = vector.multi_reduction <maximumf>, %26, %cst_13 [2] : vector<2x16x16xf32> to vector<2x16xf32>
    %28 = vector.shape_cast %27 : vector<2x16xf32> to vector<2x16x1xf32>
    %29 = vector.broadcast %28 : vector<2x16x1xf32> to vector<2x16x16xf32>
    %30 = arith.subf %26, %29 : vector<2x16x16xf32>
    %31 = math.exp %30 : vector<2x16x16xf32>
    %cst_14 = arith.constant dense<0.000000e+00> : vector<2x16xf32>
    %32 = vector.multi_reduction <add>, %31, %cst_14 [2] : vector<2x16x16xf32> to vector<2x16xf32>
    %33 = vector.shape_cast %32 : vector<2x16xf32> to vector<2x16x1xf32>
    %34 = tpu.reciprocal %33 {approx = true} : vector<2x16x1xf32> -> vector<2x16x1xf32>
    %35 = vector.broadcast %34 : vector<2x16x1xf32> to vector<2x16x16xf32>
    %36 = arith.mulf %31, %35 : vector<2x16x16xf32>
    %37 = arith.truncf %36 : vector<2x16x16xf32> to vector<2x16x16xbf16>
    "tpu.trace_start"() <{level = 10 : i32, message = "bqk,bkd->bqd"}> : () -> ()
    %cst_15 = arith.constant dense<0.000000e+00> : vector<2x16x32xf32>
    %38 = tpu.matmul %37, %22, %cst_15 {dimension_numbers = #tpu.dot_dimension_numbers<[2], [1], [1], [2], [0, 0, 0, 1, 1, 2], [0], [0]>} : vector<2x16x16xbf16>, vector<2x16x32xbf16>, vector<2x16x32xf32> -> vector<2x16x32xf32>
    "tpu.trace_stop"() : () -> ()
    %39 = vector.shape_cast %38 : vector<2x16x32xf32> to vector<32x32xf32>
    %40 = arith.truncf %39 : vector<32x32xf32> to vector<32x32xbf16>
    %41 = vector.extract_strided_slice %8 {offsets = [0, 0], sizes = [32, 128], strides = [1, 1]} : vector<128x128xbf16> to vector<32x128xbf16>
    %cst_16 = arith.constant dense<0.000000e+00> : vector<32x128xf32>
    %42 = tpu.matmul %40, %41, %cst_16 {dimension_numbers = #tpu.dot_dimension_numbers<[1], [0], [0], [1], [0, 0, 1, 1], [], []>} : vector<32x32xbf16>, vector<32x128xbf16>, vector<32x128xf32> -> vector<32x128xf32>
    %43 = arith.addf %13, %42 : vector<32x128xf32>
    %44 = vector.extract_strided_slice %7 {offsets = [0, 32], sizes = [32, 32], strides = [1, 1]} : vector<32x384xf32> to vector<32x32xf32>
    %45 = vector.shape_cast %44 : vector<32x32xf32> to vector<2x16x32xf32>
    %46 = arith.truncf %45 : vector<2x16x32xf32> to vector<2x16x32xbf16>
    %47 = vector.extract_strided_slice %7 {offsets = [0, 160], sizes = [32, 32], strides = [1, 1]} : vector<32x384xf32> to vector<32x32xf32>
    %48 = vector.shape_cast %47 : vector<32x32xf32> to vector<2x16x32xf32>
    %49 = arith.truncf %48 : vector<2x16x32xf32> to vector<2x16x32xbf16>
    %50 = vector.extract_strided_slice %7 {offsets = [0, 288], sizes = [32, 32], strides = [1, 1]} : vector<32x384xf32> to vector<32x32xf32>
    %51 = vector.shape_cast %50 : vector<32x32xf32> to vector<2x16x32xf32>
    %52 = arith.truncf %51 : vector<2x16x32xf32> to vector<2x16x32xbf16>
    "tpu.trace_start"() <{level = 10 : i32, message = "bqd,bkd->bqk"}> : () -> ()
    %cst_17 = arith.constant dense<0.000000e+00> : vector<2x16x16xf32>
    %53 = tpu.matmul %46, %49, %cst_17 {dimension_numbers = #tpu.dot_dimension_numbers<[2], [2], [1], [1], [0, 0, 0, 1, 1, 1], [0], [0]>} : vector<2x16x32xbf16>, vector<2x16x32xbf16>, vector<2x16x16xf32> -> vector<2x16x16xf32>
    "tpu.trace_stop"() : () -> ()
    %cst_18 = arith.constant 0.176776692 : f32
    %54 = vector.broadcast %cst_18 : f32 to vector<2x16x16xf32>
    %55 = arith.mulf %53, %54 : vector<2x16x16xf32>
    %56 = arith.addf %55, %12 : vector<2x16x16xf32>
    %cst_19 = arith.constant dense<0xFF800000> : vector<2x16xf32>
    %57 = vector.multi_reduction <maximumf>, %56, %cst_19 [2] : vector<2x16x16xf32> to vector<2x16xf32>
    %58 = vector.shape_cast %57 : vector<2x16xf32> to vector<2x16x1xf32>
    %59 = vector.broadcast %58 : vector<2x16x1xf32> to vector<2x16x16xf32>
    %60 = arith.subf %56, %59 : vector<2x16x16xf32>
    %61 = math.exp %60 : vector<2x16x16xf32>
    %cst_20 = arith.constant dense<0.000000e+00> : vector<2x16xf32>
    %62 = vector.multi_reduction <add>, %61, %cst_20 [2] : vector<2x16x16xf32> to vector<2x16xf32>
    %63 = vector.shape_cast %62 : vector<2x16xf32> to vector<2x16x1xf32>
    %64 = tpu.reciprocal %63 {approx = true} : vector<2x16x1xf32> -> vector<2x16x1xf32>
    %65 = vector.broadcast %64 : vector<2x16x1xf32> to vector<2x16x16xf32>
    %66 = arith.mulf %61, %65 : vector<2x16x16xf32>
    %67 = arith.truncf %66 : vector<2x16x16xf32> to vector<2x16x16xbf16>
    "tpu.trace_start"() <{level = 10 : i32, message = "bqk,bkd->bqd"}> : () -> ()
    %cst_21 = arith.constant dense<0.000000e+00> : vector<2x16x32xf32>
    %68 = tpu.matmul %67, %52, %cst_21 {dimension_numbers = #tpu.dot_dimension_numbers<[2], [1], [1], [2], [0, 0, 0, 1, 1, 2], [0], [0]>} : vector<2x16x16xbf16>, vector<2x16x32xbf16>, vector<2x16x32xf32> -> vector<2x16x32xf32>
    "tpu.trace_stop"() : () -> ()
    %69 = vector.shape_cast %68 : vector<2x16x32xf32> to vector<32x32xf32>
    %70 = arith.truncf %69 : vector<32x32xf32> to vector<32x32xbf16>
    %71 = vector.extract_strided_slice %8 {offsets = [32, 0], sizes = [32, 128], strides = [1, 1]} : vector<128x128xbf16> to vector<32x128xbf16>
    %cst_22 = arith.constant dense<0.000000e+00> : vector<32x128xf32>
    %72 = tpu.matmul %70, %71, %cst_22 {dimension_numbers = #tpu.dot_dimension_numbers<[1], [0], [0], [1], [0, 0, 1, 1], [], []>} : vector<32x32xbf16>, vector<32x128xbf16>, vector<32x128xf32> -> vector<32x128xf32>
    %73 = arith.addf %43, %72 : vector<32x128xf32>
    %74 = vector.extract_strided_slice %7 {offsets = [0, 64], sizes = [32, 32], strides = [1, 1]} : vector<32x384xf32> to vector<32x32xf32>
    %75 = vector.shape_cast %74 : vector<32x32xf32> to vector<2x16x32xf32>
    %76 = arith.truncf %75 : vector<2x16x32xf32> to vector<2x16x32xbf16>
    %77 = vector.extract_strided_slice %7 {offsets = [0, 192], sizes = [32, 32], strides = [1, 1]} : vector<32x384xf32> to vector<32x32xf32>
    %78 = vector.shape_cast %77 : vector<32x32xf32> to vector<2x16x32xf32>
    %79 = arith.truncf %78 : vector<2x16x32xf32> to vector<2x16x32xbf16>
    %80 = vector.extract_strided_slice %7 {offsets = [0, 320], sizes = [32, 32], strides = [1, 1]} : vector<32x384xf32> to vector<32x32xf32>
    %81 = vector.shape_cast %80 : vector<32x32xf32> to vector<2x16x32xf32>
    %82 = arith.truncf %81 : vector<2x16x32xf32> to vector<2x16x32xbf16>
    "tpu.trace_start"() <{level = 10 : i32, message = "bqd,bkd->bqk"}> : () -> ()
    %cst_23 = arith.constant dense<0.000000e+00> : vector<2x16x16xf32>
    %83 = tpu.matmul %76, %79, %cst_23 {dimension_numbers = #tpu.dot_dimension_numbers<[2], [2], [1], [1], [0, 0, 0, 1, 1, 1], [0], [0]>} : vector<2x16x32xbf16>, vector<2x16x32xbf16>, vector<2x16x16xf32> -> vector<2x16x16xf32>
    "tpu.trace_stop"() : () -> ()
    %cst_24 = arith.constant 0.176776692 : f32
    %84 = vector.broadcast %cst_24 : f32 to vector<2x16x16xf32>
    %85 = arith.mulf %83, %84 : vector<2x16x16xf32>
    %86 = arith.addf %85, %12 : vector<2x16x16xf32>
    %cst_25 = arith.constant dense<0xFF800000> : vector<2x16xf32>
    %87 = vector.multi_reduction <maximumf>, %86, %cst_25 [2] : vector<2x16x16xf32> to vector<2x16xf32>
    %88 = vector.shape_cast %87 : vector<2x16xf32> to vector<2x16x1xf32>
    %89 = vector.broadcast %88 : vector<2x16x1xf32> to vector<2x16x16xf32>
    %90 = arith.subf %86, %89 : vector<2x16x16xf32>
    %91 = math.exp %90 : vector<2x16x16xf32>
    %cst_26 = arith.constant dense<0.000000e+00> : vector<2x16xf32>
    %92 = vector.multi_reduction <add>, %91, %cst_26 [2] : vector<2x16x16xf32> to vector<2x16xf32>
    %93 = vector.shape_cast %92 : vector<2x16xf32> to vector<2x16x1xf32>
    %94 = tpu.reciprocal %93 {approx = true} : vector<2x16x1xf32> -> vector<2x16x1xf32>
    %95 = vector.broadcast %94 : vector<2x16x1xf32> to vector<2x16x16xf32>
    %96 = arith.mulf %91, %95 : vector<2x16x16xf32>
    %97 = arith.truncf %96 : vector<2x16x16xf32> to vector<2x16x16xbf16>
    "tpu.trace_start"() <{level = 10 : i32, message = "bqk,bkd->bqd"}> : () -> ()
    %cst_27 = arith.constant dense<0.000000e+00> : vector<2x16x32xf32>
    %98 = tpu.matmul %97, %82, %cst_27 {dimension_numbers = #tpu.dot_dimension_numbers<[2], [1], [1], [2], [0, 0, 0, 1, 1, 2], [0], [0]>} : vector<2x16x16xbf16>, vector<2x16x32xbf16>, vector<2x16x32xf32> -> vector<2x16x32xf32>
    "tpu.trace_stop"() : () -> ()
    %99 = vector.shape_cast %98 : vector<2x16x32xf32> to vector<32x32xf32>
    %100 = arith.truncf %99 : vector<32x32xf32> to vector<32x32xbf16>
    %101 = vector.extract_strided_slice %8 {offsets = [64, 0], sizes = [32, 128], strides = [1, 1]} : vector<128x128xbf16> to vector<32x128xbf16>
    %cst_28 = arith.constant dense<0.000000e+00> : vector<32x128xf32>
    %102 = tpu.matmul %100, %101, %cst_28 {dimension_numbers = #tpu.dot_dimension_numbers<[1], [0], [0], [1], [0, 0, 1, 1], [], []>} : vector<32x32xbf16>, vector<32x128xbf16>, vector<32x128xf32> -> vector<32x128xf32>
    %103 = arith.addf %73, %102 : vector<32x128xf32>
    %104 = vector.extract_strided_slice %7 {offsets = [0, 96], sizes = [32, 32], strides = [1, 1]} : vector<32x384xf32> to vector<32x32xf32>
    %105 = vector.shape_cast %104 : vector<32x32xf32> to vector<2x16x32xf32>
    %106 = arith.truncf %105 : vector<2x16x32xf32> to vector<2x16x32xbf16>
    %107 = vector.extract_strided_slice %7 {offsets = [0, 224], sizes = [32, 32], strides = [1, 1]} : vector<32x384xf32> to vector<32x32xf32>
    %108 = vector.shape_cast %107 : vector<32x32xf32> to vector<2x16x32xf32>
    %109 = arith.truncf %108 : vector<2x16x32xf32> to vector<2x16x32xbf16>
    %110 = vector.extract_strided_slice %7 {offsets = [0, 352], sizes = [32, 32], strides = [1, 1]} : vector<32x384xf32> to vector<32x32xf32>
    %111 = vector.shape_cast %110 : vector<32x32xf32> to vector<2x16x32xf32>
    %112 = arith.truncf %111 : vector<2x16x32xf32> to vector<2x16x32xbf16>
    "tpu.trace_start"() <{level = 10 : i32, message = "bqd,bkd->bqk"}> : () -> ()
    %cst_29 = arith.constant dense<0.000000e+00> : vector<2x16x16xf32>
    %113 = tpu.matmul %106, %109, %cst_29 {dimension_numbers = #tpu.dot_dimension_numbers<[2], [2], [1], [1], [0, 0, 0, 1, 1, 1], [0], [0]>} : vector<2x16x32xbf16>, vector<2x16x32xbf16>, vector<2x16x16xf32> -> vector<2x16x16xf32>
    "tpu.trace_stop"() : () -> ()
    %cst_30 = arith.constant 0.176776692 : f32
    %114 = vector.broadcast %cst_30 : f32 to vector<2x16x16xf32>
    %115 = arith.mulf %113, %114 : vector<2x16x16xf32>
    %116 = arith.addf %115, %12 : vector<2x16x16xf32>
    %cst_31 = arith.constant dense<0xFF800000> : vector<2x16xf32>
    %117 = vector.multi_reduction <maximumf>, %116, %cst_31 [2] : vector<2x16x16xf32> to vector<2x16xf32>
    %118 = vector.shape_cast %117 : vector<2x16xf32> to vector<2x16x1xf32>
    %119 = vector.broadcast %118 : vector<2x16x1xf32> to vector<2x16x16xf32>
    %120 = arith.subf %116, %119 : vector<2x16x16xf32>
    %121 = math.exp %120 : vector<2x16x16xf32>
    %cst_32 = arith.constant dense<0.000000e+00> : vector<2x16xf32>
    %122 = vector.multi_reduction <add>, %121, %cst_32 [2] : vector<2x16x16xf32> to vector<2x16xf32>
    %123 = vector.shape_cast %122 : vector<2x16xf32> to vector<2x16x1xf32>
    %124 = tpu.reciprocal %123 {approx = true} : vector<2x16x1xf32> -> vector<2x16x1xf32>
    %125 = vector.broadcast %124 : vector<2x16x1xf32> to vector<2x16x16xf32>
    %126 = arith.mulf %121, %125 : vector<2x16x16xf32>
    %127 = arith.truncf %126 : vector<2x16x16xf32> to vector<2x16x16xbf16>
    "tpu.trace_start"() <{level = 10 : i32, message = "bqk,bkd->bqd"}> : () -> ()
    %cst_33 = arith.constant dense<0.000000e+00> : vector<2x16x32xf32>
    %128 = tpu.matmul %127, %112, %cst_33 {dimension_numbers = #tpu.dot_dimension_numbers<[2], [1], [1], [2], [0, 0, 0, 1, 1, 2], [0], [0]>} : vector<2x16x16xbf16>, vector<2x16x32xbf16>, vector<2x16x32xf32> -> vector<2x16x32xf32>
    "tpu.trace_stop"() : () -> ()
    %129 = vector.shape_cast %128 : vector<2x16x32xf32> to vector<32x32xf32>
    %130 = arith.truncf %129 : vector<32x32xf32> to vector<32x32xbf16>
    %131 = vector.extract_strided_slice %8 {offsets = [96, 0], sizes = [32, 128], strides = [1, 1]} : vector<128x128xbf16> to vector<32x128xbf16>
    %cst_34 = arith.constant dense<0.000000e+00> : vector<32x128xf32>
    %132 = tpu.matmul %130, %131, %cst_34 {dimension_numbers = #tpu.dot_dimension_numbers<[1], [0], [0], [1], [0, 0, 1, 1], [], []>} : vector<32x32xbf16>, vector<32x128xbf16>, vector<32x128xf32> -> vector<32x128xf32>
    %133 = arith.addf %103, %132 : vector<32x128xf32>
    %c0_35 = arith.constant 0 : index
    %c0_36 = arith.constant 0 : index
    %134 = vector.load %arg5[%c0_35, %c0_36] : memref<1x128xf32, #tpu.memory_space<vmem>>, vector<1x128xf32>
    %135 = vector.broadcast %134 : vector<1x128xf32> to vector<32x128xf32>
    %136 = arith.addf %133, %135 : vector<32x128xf32>
    %137 = vector.shape_cast %136 : vector<32x128xf32> to vector<2x16x128xf32>
    %c0_37 = arith.constant 0 : index
    %c0_38 = arith.constant 0 : index
    %c0_39 = arith.constant 0 : index
    %138 = vector.load %arg7[%c0_37, %c0_38, %c0_39] : memref<2x16x128xf32, #tpu.memory_space<vmem>>, vector<2x16x128xf32>
    tpu.vector_store %arg7[%c0_37, %c0_38, %c0_39], %137 {strides = array<i32>} : memref<2x16x128xf32, #tpu.memory_space<vmem>>, vector<2x16x128xf32>,
    return
  }
  func.func @transform_0(%arg0: i32) -> (i32, i32, i32) {
    %c0_i32 = arith.constant 0 : i32
    %c0_i32_0 = arith.constant 0 : i32
    %c0_i32_1 = arith.constant 0 : i32
    return %arg0, %c0_i32, %c0_i32_0 : i32, i32, i32
  }
  func.func @transform_1(%arg0: i32) -> (i32, i32) {
    %c0_i32 = arith.constant 0 : i32
    %c0_i32_0 = arith.constant 0 : i32
    %c0_i32_1 = arith.constant 0 : i32
    return %c0_i32, %c0_i32_0 : i32, i32
  }
  func.func @transform_2(%arg0: i32) -> (i32, i32) {
    %c0_i32 = arith.constant 0 : i32
    %c0_i32_0 = arith.constant 0 : i32
    %c0_i32_1 = arith.constant 0 : i32
    return %c0_i32, %c0_i32_0 : i32, i32
  }
  func.func @transform_3(%arg0: i32) -> (i32, i32) {
    %c0_i32 = arith.constant 0 : i32
    %c0_i32_0 = arith.constant 0 : i32
    %c0_i32_1 = arith.constant 0 : i32
    return %c0_i32, %c0_i32_0 : i32, i32
  }
  func.func @transform_4(%arg0: i32) -> (i32, i32) {
    %c0_i32 = arith.constant 0 : i32
    %c0_i32_0 = arith.constant 0 : i32
    %c0_i32_1 = arith.constant 0 : i32
    return %c0_i32, %c0_i32_0 : i32, i32
  }
  func.func @transform_5(%arg0: i32) -> (i32, i32) {
    %c0_i32 = arith.constant 0 : i32
    %c0_i32_0 = arith.constant 0 : i32
    %c0_i32_1 = arith.constant 0 : i32
    return %c0_i32, %c0_i32_0 : i32, i32
  }
  func.func @transform_6(%arg0: i32) -> (i32, i32, i32) {
    %c0_i32 = arith.constant 0 : i32
    %c0_i32_0 = arith.constant 0 : i32
    %c0_i32_1 = arith.constant 0 : i32
    return %arg0, %c0_i32, %c0_i32_0 : i32, i32, i32
  }
}

</mosaic_0001>

<llo_original>
// kernel: tpu_custom_call.1
$region0: #{tpu_custom_call.1}
  #allocation0 [shape = 'u32[]', space=smem, size = 0x4, offset = 0x4, fixed_abs, tag = 'smem constant byte address 0x4 - core index']
  #allocation1 [shape = 'u32[144,128]{1,0:T(1,128)}', space=vmem, size = 0x12000, scoped, tag = 'internal scratch']
  %s0 = inlined_call_operand.hbm [shape: f32[4,16,128], index: 0, kind: input, shape index: {}]
  %s1 = inlined_call_operand.hbm [shape: bf16[128,384], index: 1, kind: input, shape index: {}]
  %s2 = inlined_call_operand.vmem [shape: f32[1,384], index: 2, kind: input, shape index: {}]
  %s3 = inlined_call_operand.hbm [shape: bf16[128,128], index: 3, kind: input, shape index: {}]
  %s4 = inlined_call_operand.vmem [shape: f32[1,128], index: 4, kind: input, shape index: {}]
  %s5 = inlined_call_operand.hbm [shape: f32[16,16], index: 5, kind: input, shape index: {}]
  %s6 = inlined_call_operand.hbm [shape: f32[4,16,128], index: 6, kind: output, shape index: {}]
  %s7 = sld [smem:[#allocation0]]
  $region73: #{tpu_custom_call.1} parent=0
    _
  %s9 = ssub.s32 1, %s7
  %s10 = scalar_select 0, %s9, %s7
  $region1: #{tpu_custom_call.1} parent=0
    #allocation2 [shape = 'u8[32768]{0}', space=vmem, size = 0x8000, scoped, tag = 'input window, operand 0']
    #allocation3 [shape = 's32[2]{0}', space=sflag, size = 0x8, scoped, tag = 'scoped memory for tpu_custom_call.1']
    #allocation4 [shape = 's32[2]{0}', space=sflag, size = 0x8, scoped, tag = 'scoped memory for tpu_custom_call.1']
    #allocation5 [shape = 'u8[98304]{0}', space=vmem, size = 0x18000, scoped, tag = 'input window, operand 1, single buffered']
    #allocation6 [shape = 's32[1]{0}', space=sflag, size = 0x4, scoped, tag = 'scoped memory for tpu_custom_call.1']
    #allocation7 [shape = 'u8[32768]{0}', space=vmem, size = 0x8000, scoped, tag = 'input window, operand 3, single buffered']
    #allocation8 [shape = 'u8[8192]{0}', space=vmem, size = 0x2000, scoped, tag = 'input window, operand 5, single buffered']
    #allocation9 [shape = 's32[1]{0}', space=sflag, size = 0x4, scoped, tag = 'scoped memory for tpu_custom_call.1']
    #allocation10 [shape = 'u8[32768]{0}', space=vmem, size = 0x8000, scoped, tag = 'output window, operand 0']
    %11 = vsyncpa [#allocation3], 0
    %s12 = scalar_lea.sflag [#allocation3], 1
    %13 = vsyncpa %s12, 0
    %14 = vsyncpa [#allocation6], 0
    %15 = vsyncpa [#allocation9], 0
    %16 = vsyncpa [#allocation4], 0
    %s17 = scalar_lea.sflag [#allocation4], 1
    %18 = vsyncpa %s17, 0
    loop: start=0, step=1, limit=4
    $region2: #{tpu_custom_call.1} parent=1 // loop_pre_header
      _
    $region3: #{tpu_custom_call.1} parent=1 // loop_header
      %s20 = sphi 0, %s24
      %p21 = scmp.ge.s32.totalorder %s20, 4
      %s30 = sphi 0, %s32
      %s33 = sphi 0, %s30
      %s34 = sphi 0, %s33
      %s50 = sphi 0, %s34
      %s54 = sphi 0, %s54
      %s56 = sphi 0, %s54
      %s57 = sphi 0, %s56
      %s71 = sphi 0, %s57
      %s75 = sphi 0, %s75
      %s77 = sphi 0, %s75
      %s78 = sphi 0, %s77
      %s92 = sphi 0, %s78
      %s96 = sphi 0, %s96
      %s98 = sphi 0, %s96
      %s99 = sphi 0, %s98
      %s113 = sphi 0, %s99
      %s117 = sphi 0, %s117
      %s119 = sphi 0, %s117
      %s120 = sphi 0, %s119
      %s134 = sphi 0, %s120
      %s138 = sphi 0, %s138
      %s140 = sphi 0, %s138
      %s141 = sphi 0, %s140
      %s155 = sphi 0, %s141
      %s161 = sphi 0, %s163
      %s164 = sphi 0, %s161
      %s165 = sphi 0, %s164
      %s181 = sphi 0, %s165
    $region4: #{tpu_custom_call.1} parent=1 // loop_header_branch
      %23 = sbr.rel (%p21) target = $region8
    $region5: #{tpu_custom_call.1} parent=1 // loop_body
      %s25 = ssub.s32 %s20, 1
      %s26 = ssub.s32 %s20, 2
      %s27 = sadd.s32 %s20, 1
      %s28 = ssub.s32 %s20, %s27
      %p29 = scmp.eq.s32.totalorder %s28, 0
      %s31 = sadd.s32 %s30, 1
      %s32 = scalar_select %p29, %s30, %s31
      %p35 = pneg %p29
      %p36 = scmp.eq.s32.totalorder %s20, 1
      %p37 = por %p35, %p36
      %p38 = scmp.ne.s32.totalorder %s30, %s33
      %p39 = scmp.eq.s32.totalorder %s20, 0
      %p40 = por %p38, %p39
      %p41 = scmp.ne.s32.totalorder %s30, %s33
      %p42 = scmp.eq.s32.totalorder %s25, 1
      %p43 = por %p41, %p42
      %p44 = scmp.ne.s32.totalorder %s33, %s34
      %p45 = scmp.eq.s32.totalorder %s25, 0
      %p46 = por %p44, %p45
      %p47 = scmp.ne.s32.totalorder %s33, %s34
      %p48 = scmp.eq.s32.totalorder %s26, 1
      %p49 = por %p47, %p48
      %p51 = scmp.ne.s32.totalorder %s34, %s50
      %p52 = scmp.eq.s32.totalorder %s26, 0
      %p53 = por %p51, %p52
      %s55 = sadd.s32 %s54, 1
      %p58 = scmp.eq.s32.totalorder %s20, 1
      %p59 = scmp.ne.s32.totalorder %s54, %s56
      %p60 = scmp.eq.s32.totalorder %s20, 0
      %p61 = por %p59, %p60
      %p62 = scmp.ne.s32.totalorder %s54, %s56
      %p63 = scmp.eq.s32.totalorder %s25, 1
      %p64 = por %p62, %p63
      %p65 = scmp.ne.s32.totalorder %s56, %s57
      %p66 = scmp.eq.s32.totalorder %s25, 0
      %p67 = por %p65, %p66
      %p68 = scmp.ne.s32.totalorder %s56, %s57
      %p69 = scmp.eq.s32.totalorder %s26, 1
      %p70 = por %p68, %p69
      %p72 = scmp.ne.s32.totalorder %s57, %s71
      %p73 = scmp.eq.s32.totalorder %s26, 0
      %p74 = por %p72, %p73
      %s76 = sadd.s32 %s75, 1
      %p79 = scmp.eq.s32.totalorder %s20, 1
      %p80 = scmp.ne.s32.totalorder %s75, %s77
      %p81 = scmp.eq.s32.totalorder %s20, 0
      %p82 = por %p80, %p81
      %p83 = scmp.ne.s32.totalorder %s75, %s77
      %p84 = scmp.eq.s32.totalorder %s25, 1
      %p85 = por %p83, %p84
      %p86 = scmp.ne.s32.totalorder %s77, %s78
      %p87 = scmp.eq.s32.totalorder %s25, 0
      %p88 = por %p86, %p87
      %p89 = scmp.ne.s32.totalorder %s77, %s78
      %p90 = scmp.eq.s32.totalorder %s26, 1
      %p91 = por %p89, %p90
      %p93 = scmp.ne.s32.totalorder %s78, %s92
      %p94 = scmp.eq.s32.totalorder %s26, 0
      %p95 = por %p93, %p94
      %s97 = sadd.s32 %s96, 1
      %p100 = scmp.eq.s32.totalorder %s20, 1
      %p101 = scmp.ne.s32.totalorder %s96, %s98
      %p102 = scmp.eq.s32.totalorder %s20, 0
      %p103 = por %p101, %p102
      %p104 = scmp.ne.s32.totalorder %s96, %s98
      %p105 = scmp.eq.s32.totalorder %s25, 1
      %p106 = por %p104, %p105
      %p107 = scmp.ne.s32.totalorder %s98, %s99
      %p108 = scmp.eq.s32.totalorder %s25, 0
      %p109 = por %p107, %p108
      %p110 = scmp.ne.s32.totalorder %s98, %s99
      %p111 = scmp.eq.s32.totalorder %s26, 1
      %p112 = por %p110, %p111
      %p114 = scmp.ne.s32.totalorder %s99, %s113
      %p115 = scmp.eq.s32.totalorder %s26, 0
      %p116 = por %p114, %p115
      %s118 = sadd.s32 %s117, 1
      %p121 = scmp.eq.s32.totalorder %s20, 1
      %p122 = scmp.ne.s32.totalorder %s117, %s119
      %p123 = scmp.eq.s32.totalorder %s20, 0
      %p124 = por %p122, %p123
      %p125 = scmp.ne.s32.totalorder %s117, %s119
      %p126 = scmp.eq.s32.totalorder %s25, 1
      %p127 = por %p125, %p126
      %p128 = scmp.ne.s32.totalorder %s119, %s120
      %p129 = scmp.eq.s32.totalorder %s25, 0
      %p130 = por %p128, %p129
      %p131 = scmp.ne.s32.totalorder %s119, %s120
      %p132 = scmp.eq.s32.totalorder %s26, 1
      %p133 = por %p131, %p132
      %p135 = scmp.ne.s32.totalorder %s120, %s134
      %p136 = scmp.eq.s32.totalorder %s26, 0
      %p137 = por %p135, %p136
      %s139 = sadd.s32 %s138, 1
      %p142 = scmp.eq.s32.totalorder %s20, 1
      %p143 = scmp.ne.s32.totalorder %s138, %s140
      %p144 = scmp.eq.s32.totalorder %s20, 0
      %p145 = por %p143, %p144
      %p146 = scmp.ne.s32.totalorder %s138, %s140
      %p147 = scmp.eq.s32.totalorder %s25, 1
      %p148 = por %p146, %p147
      %p149 = scmp.ne.s32.totalorder %s140, %s141
      %p150 = scmp.eq.s32.totalorder %s25, 0
      %p151 = por %p149, %p150
      %p152 = scmp.ne.s32.totalorder %s140, %s141
      %p153 = scmp.eq.s32.totalorder %s26, 1
      %p154 = por %p152, %p153
      %p156 = scmp.ne.s32.totalorder %s141, %s155
      %p157 = scmp.eq.s32.totalorder %s26, 0
      %p158 = por %p156, %p157
      %s159 = ssub.s32 %s20, %s27
      %p160 = scmp.eq.s32.totalorder %s159, 0
      %s162 = sadd.s32 %s161, 1
      %s163 = scalar_select %p160, %s161, %s162
      %p166 = pneg %p160
      %p167 = scmp.eq.s32.totalorder %s20, 1
      %p168 = por %p166, %p167
      %p169 = scmp.ne.s32.totalorder %s161, %s164
      %p170 = scmp.eq.s32.totalorder %s20, 0
      %p171 = por %p169, %p170
      %p172 = scmp.ne.s32.totalorder %s161, %s164
      %p173 = scmp.eq.s32.totalorder %s25, 1
      %p174 = por %p172, %p173
      %p175 = scmp.ne.s32.totalorder %s164, %s165
      %p176 = scmp.eq.s32.totalorder %s25, 0
      %p177 = por %p175, %p176
      %p178 = scmp.ne.s32.totalorder %s164, %s165
      %p179 = scmp.eq.s32.totalorder %s26, 1
      %p180 = por %p178, %p179
      %p182 = scmp.ne.s32.totalorder %s165, %s181
      %p183 = scmp.eq.s32.totalorder %s26, 0
      %p184 = por %p182, %p183
      %p185 = scmp.le.s32.totalorder 1, %s20
      %p186 = scmp.lt.s32.totalorder %s20, 3
      %p187 = pnand %p185, %p186
      %p188 = pneg %p187
      // Predicated region
      $region9: #{tpu_custom_call.1} parent=5 // pred_check
        _
      $region10: #{tpu_custom_call.1} parent=5 // pred_check_branch
        %190 = sbr.rel (%p187) target = $region12
      $region11: #{tpu_custom_call.1} parent=5 // pred_region
        %s191 = ssub.s32 %s20, 1
        // Predicated region
        $region13: #{tpu_custom_call.1} parent=11 // pred_check
          %p192 = pneg %p67
        $region14: #{tpu_custom_call.1} parent=11 // pred_check_branch
          %194 = sbr.rel (%p192) target = $region16
        $region15: #{tpu_custom_call.1} parent=11 // pred_region
          %s196 = ssub.s32 3072, 3072
          %197 = vsyncadd [#allocation6], %s196
          %s198 = sshll.u32 [#allocation5], 4
          %s199 = int_to_ptr.vmem [resolvable:$true] %s198
          %204 = dma.hbm_to_vmem [thread:$0]  %s1, 3072, %s199, [#allocation6], 192, 192, 12
        $region16: #{tpu_custom_call.1} parent=11 // pred_fallthru
          _
        // Predicated region
        $region17: #{tpu_custom_call.1} parent=11 // pred_check
          %p205 = pneg %p88
        $region18: #{tpu_custom_call.1} parent=11 // pred_check_branch
          %207 = sbr.rel (%p205) target = $region20
        $region19: #{tpu_custom_call.1} parent=11 // pred_region
          _
        $region20: #{tpu_custom_call.1} parent=11 // pred_fallthru
          _
        // Predicated region
        $region21: #{tpu_custom_call.1} parent=11 // pred_check
          %p208 = pneg %p109
        $region22: #{tpu_custom_call.1} parent=11 // pred_check_branch
          %210 = sbr.rel (%p208) target = $region24
        $region23: #{tpu_custom_call.1} parent=11 // pred_region
          %s212 = ssub.s32 1024, 1024
          %213 = vsyncadd [#allocation6], %s212
          %s214 = sshll.u32 [#allocation7], 4
          %s215 = int_to_ptr.vmem [resolvable:$true] %s214
          %220 = dma.hbm_to_vmem [thread:$0]  %s3, 1024, %s215, [#allocation6], 64, 64, 4
        $region24: #{tpu_custom_call.1} parent=11 // pred_fallthru
          _
        // Predicated region
        $region25: #{tpu_custom_call.1} parent=11 // pred_check
          %p221 = pneg %p130
        $region26: #{tpu_custom_call.1} parent=11 // pred_check_branch
          %223 = sbr.rel (%p221) target = $region28
        $region27: #{tpu_custom_call.1} parent=11 // pred_region
          _
        $region28: #{tpu_custom_call.1} parent=11 // pred_fallthru
          _
        // Predicated region
        $region29: #{tpu_custom_call.1} parent=11 // pred_check
          %p224 = pneg %p151
        $region30: #{tpu_custom_call.1} parent=11 // pred_check_branch
          %226 = sbr.rel (%p224) target = $region32
        $region31: #{tpu_custom_call.1} parent=11 // pred_region
          %s228 = ssub.s32 256, 256
          %229 = vsyncadd [#allocation9], %s228
          %s230 = sshll.u32 [#allocation8], 4
          %s231 = int_to_ptr.vmem [resolvable:$true] %s230
          %236 = dma.hbm_to_vmem [thread:$0]  %s5, 256, %s231, [#allocation9], 128, 128, 8
        $region32: #{tpu_custom_call.1} parent=11 // pred_fallthru
          _
      $region12: #{tpu_custom_call.1} parent=5 // pred_fallthru
        _
      %p237 = scmp.lt.s32.totalorder %s20, 2
      // Predicated region
      $region33: #{tpu_custom_call.1} parent=5 // pred_check
        %p238 = pneg %p237
      $region34: #{tpu_custom_call.1} parent=5 // pred_check_branch
        %240 = sbr.rel (%p238) target = $region36
      $region35: #{tpu_custom_call.1} parent=5 // pred_region
        // Predicated region
        $region37: #{tpu_custom_call.1} parent=35 // pred_check
          %p241 = pneg %p40
        $region38: #{tpu_custom_call.1} parent=35 // pred_check_branch
          %243 = sbr.rel (%p241) target = $region40
        $region39: #{tpu_custom_call.1} parent=35 // pred_region
          %s244 = sand.u32 %s30, 1
          %s245 = scalar_lea.sflag [#allocation3], %s244
          %s246 = sand.u32 %s30, 1
          %s247 = smul.addr %s246, 32
          %s248 = scalar_lea.vmem [#allocation2], %s247
          %s249 = smul.u32 2, %s20
          %s251 = ssub.s32 512, 512
          %252 = vsyncadd %s245, %s251
          %s253 = smul.addr %s249, 2
          %s254 = smul.addr %s253, 128
          %s255 = scalar_lea.hbm %s0, %s254
          %s256 = sshll.u32 %s248, 4
          %s257 = int_to_ptr.vmem [resolvable:$true] %s256
          %262 = dma.hbm_to_vmem [thread:$0]  %s255, 512, %s257, %s245, 128, 128, 8
        $region40: #{tpu_custom_call.1} parent=35 // pred_fallthru
          _
      $region36: #{tpu_custom_call.1} parent=5 // pred_fallthru
        _
      %p263 = scmp.le.s32.totalorder 1, %s20
      %p264 = scmp.lt.s32.totalorder %s20, 3
      %p265 = pnand %p263, %p264
      %p266 = pneg %p265
      // Predicated region
      $region41: #{tpu_custom_call.1} parent=5 // pred_check
        _
      $region42: #{tpu_custom_call.1} parent=5 // pred_check_branch
        %268 = sbr.rel (%p265) target = $region44
      $region43: #{tpu_custom_call.1} parent=5 // pred_region
        %s269 = ssub.s32 %s20, 1
        %s270 = sand.u32 %s33, 1
        %s271 = scalar_lea.sflag [#allocation3], %s270
        %s272 = sand.u32 %s33, 1
        %s273 = smul.addr %s272, 32
        %s274 = scalar_lea.vmem [#allocation2], %s273
        // Predicated region
        $region45: #{tpu_custom_call.1} parent=43 // pred_check
          %p275 = pneg %p46
        $region46: #{tpu_custom_call.1} parent=43 // pred_check_branch
          %277 = sbr.rel (%p275) target = $region48
        $region47: #{tpu_custom_call.1} parent=43 // pred_region
          %278 = dma.done %s271, 512
        $region48: #{tpu_custom_call.1} parent=43 // pred_fallthru
          _
        // Predicated region
        $region49: #{tpu_custom_call.1} parent=43 // pred_check
          %p279 = pneg %p67
        $region50: #{tpu_custom_call.1} parent=43 // pred_check_branch
          %281 = sbr.rel (%p279) target = $region52
        $region51: #{tpu_custom_call.1} parent=43 // pred_region
          %282 = dma.done [#allocation6], 3072
        $region52: #{tpu_custom_call.1} parent=43 // pred_fallthru
          _
        // Predicated region
        $region53: #{tpu_custom_call.1} parent=43 // pred_check
          %p283 = pneg %p109
        $region54: #{tpu_custom_call.1} parent=43 // pred_check_branch
          %285 = sbr.rel (%p283) target = $region56
        $region55: #{tpu_custom_call.1} parent=43 // pred_region
          %286 = dma.done [#allocation6], 1024
        $region56: #{tpu_custom_call.1} parent=43 // pred_fallthru
          _
        // Predicated region
        $region57: #{tpu_custom_call.1} parent=43 // pred_check
          %p287 = pneg %p151
        $region58: #{tpu_custom_call.1} parent=43 // pred_check_branch
          %289 = sbr.rel (%p287) target = $region60
        $region59: #{tpu_custom_call.1} parent=43 // pred_region
          %290 = dma.done [#allocation9], 256
        $region60: #{tpu_custom_call.1} parent=43 // pred_fallthru
          _
        %s291 = sand.u32 %s33, 1
        %s292 = scalar_lea.sflag [#allocation3], %s291
        %s293 = sand.u32 %s33, 1
        %s294 = smul.addr %s293, 32
        %s295 = scalar_lea.vmem [#allocation2], %s294
        %p296 = pneg %p46
        %p297 = pneg %p43
        %p298 = pneg %p67
        %p299 = pneg %p64
        %p300 = pneg %p88
        %p301 = pneg %p85
        %p302 = pneg %p109
        %p303 = pneg %p106
        %p304 = pneg %p130
        %p305 = pneg %p127
        %p306 = pneg %p151
        %p307 = pneg %p148
        %p308 = pneg %p177
        %p309 = pneg %p174
        %s310 = sand.u32 %s164, 1
        %s311 = scalar_lea.sflag [#allocation4], %s310
        %s312 = sand.u32 %s164, 1
        %s313 = smul.addr %s312, 32
        %s314 = scalar_lea.vmem [#allocation10], %s313
        %s315 = smul.u32 2, %s25
        %s316 = smul.u32 2, %s25
        %v318 = vld [vmem:[%s274] sm:$0xff]
        %v319 = vld [vmem:[%s274 + $0x8] sm:$0xff]
        %v320 = vld [vmem:[%s274 + $0x10] sm:$0xff]
        %v321 = vld [vmem:[%s274 + $0x18] sm:$0xff]
        %v322 = vpack.c.bf16 %v319, %v318
        %v323 = vpack.c.bf16 %v321, %v320
        %v324 = vld [vmem:[#allocation5] sm:$0xff]
        %v325 = vld [vmem:[#allocation5 + $0x8] sm:$0xf]
        %v326 = vld [vmem:[#allocation5 + $0xc] sm:$0xff]
        %v327 = vld [vmem:[#allocation5 + $0x14] sm:$0xf]
        %v328 = vld [vmem:[#allocation5 + $0x18] sm:$0xff]
        %v329 = vld [vmem:[#allocation5 + $0x20] sm:$0xf]
        %v330 = vld [vmem:[#allocation5 + $0x24] sm:$0xff]
        %v331 = vld [vmem:[#allocation5 + $0x2c] sm:$0xf]
        %v332 = vld [vmem:[#allocation5 + $0x30] sm:$0xff]
        %v333 = vld [vmem:[#allocation5 + $0x38] sm:$0xf]
        %v334 = vld [vmem:[#allocation5 + $0x3c] sm:$0xff]
        %v335 = vld [vmem:[#allocation5 + $0x44] sm:$0xf]
        %v336 = vld [vmem:[#allocation5 + $0x48] sm:$0xff]
        %v337 = vld [vmem:[#allocation5 + $0x50] sm:$0xf]
        %v338 = vld [vmem:[#allocation5 + $0x54] sm:$0xff]
        %v339 = vld [vmem:[#allocation5 + $0x5c] sm:$0xf]
        %v340 = vld [vmem:[#allocation5 + $0x60] sm:$0xff]
        %v341 = vld [vmem:[#allocation5 + $0x68] sm:$0xf]
        %v342 = vld [vmem:[#allocation5 + $0x6c] sm:$0xff]
        %v343 = vld [vmem:[#allocation5 + $0x74] sm:$0xf]
        %v344 = vld [vmem:[#allocation5 + $0x78] sm:$0xff]
        %v345 = vld [vmem:[#allocation5 + $0x80] sm:$0xf]
        %v346 = vld [vmem:[#allocation5 + $0x84] sm:$0xff]
        %v347 = vld [vmem:[#allocation5 + $0x8c] sm:$0xf]
        %v348 = vld [vmem:[#allocation5 + $0x90] sm:$0xff]
        %v349 = vld [vmem:[#allocation5 + $0x98] sm:$0xf]
        %v350 = vld [vmem:[#allocation5 + $0x9c] sm:$0xff]
        %v351 = vld [vmem:[#allocation5 + $0xa4] sm:$0xf]
        %v352 = vld [vmem:[#allocation5 + $0xa8] sm:$0xff]
        %v353 = vld [vmem:[#allocation5 + $0xb0] sm:$0xf]
        %v354 = vld [vmem:[#allocation5 + $0xb4] sm:$0xff]
        %v355 = vld [vmem:[#allocation5 + $0xbc] sm:$0xf]
        %v356 = vld [vmem:[%s2] sm:$0x7]
        %v358 = vlaneseq
        %v359 = vshrl.u32 %v358, 7
        %v360 = vsub.s32 0, %v359
        %v361 = vrot.slane %v356, %v360
        %v362 = vlaneseq
        %v363 = vshrl.u32 %v362, 7
        %v364 = vsub.s32 1, %v363
        %v365 = vrot.slane %v356, %v364
        %v366 = vlaneseq
        %v367 = vshrl.u32 %v366, 7
        %v368 = vsub.s32 2, %v367
        %v369 = vrot.slane %v356, %v368
        %v405 = vunpack.c.l.b16 %v324
        %v406 = vunpack.c.h.b16 %v324
        %v407 = vunpack.c.l.b16 %v325
        %v408 = vunpack.c.l.b16 %v326
        %v409 = vunpack.c.h.b16 %v326
        %v410 = vunpack.c.l.b16 %v327
        %v411 = vunpack.c.l.b16 %v328
        %v412 = vunpack.c.h.b16 %v328
        %v413 = vunpack.c.l.b16 %v329
        %v414 = vunpack.c.l.b16 %v330
        %v415 = vunpack.c.h.b16 %v330
        %v416 = vunpack.c.l.b16 %v331
        %v417 = vunpack.c.l.b16 %v332
        %v418 = vunpack.c.h.b16 %v332
        %v419 = vunpack.c.l.b16 %v333
        %v420 = vunpack.c.l.b16 %v334
        %v421 = vunpack.c.h.b16 %v334
        %v422 = vunpack.c.l.b16 %v335
        %v423 = vunpack.c.l.b16 %v336
        %v424 = vunpack.c.h.b16 %v336
        %v425 = vunpack.c.l.b16 %v337
        %v426 = vunpack.c.l.b16 %v338
        %v427 = vunpack.c.h.b16 %v338
        %v428 = vunpack.c.l.b16 %v339
        %v429 = vunpack.c.l.b16 %v340
        %v430 = vunpack.c.h.b16 %v340
        %v431 = vunpack.c.l.b16 %v341
        %v432 = vunpack.c.l.b16 %v342
        %v433 = vunpack.c.h.b16 %v342
        %v434 = vunpack.c.l.b16 %v343
        %v435 = vunpack.c.l.b16 %v344
        %v436 = vunpack.c.h.b16 %v344
        %v437 = vunpack.c.l.b16 %v345
        %v438 = vunpack.c.l.b16 %v346
        %v439 = vunpack.c.h.b16 %v346
        %v440 = vunpack.c.l.b16 %v347
        %v441 = vunpack.c.l.b16 %v348
        %v442 = vunpack.c.h.b16 %v348
        %v443 = vunpack.c.l.b16 %v349
        %v444 = vunpack.c.l.b16 %v350
        %v445 = vunpack.c.h.b16 %v350
        %v446 = vunpack.c.l.b16 %v351
        %v447 = vunpack.c.l.b16 %v352
        %v448 = vunpack.c.h.b16 %v352
        %v449 = vunpack.c.l.b16 %v353
        %v450 = vunpack.c.l.b16 %v354
        %v451 = vunpack.c.h.b16 %v354
        %v452 = vunpack.c.l.b16 %v355
        %v453 = vpack.c.b16 %v408, %v405
        %v454 = vpack.c.b16 %v409, %v406
        %v455 = vpack.c.b16 %v410, %v407
        %v456 = vpack.c.b16 %v414, %v411
        %v457 = vpack.c.b16 %v415, %v412
        %v458 = vpack.c.b16 %v416, %v413
        %v459 = vpack.c.b16 %v420, %v417
        %v460 = vpack.c.b16 %v421, %v418
        %v461 = vpack.c.b16 %v422, %v419
        %v462 = vpack.c.b16 %v426, %v423
        %v463 = vpack.c.b16 %v427, %v424
        %v464 = vpack.c.b16 %v428, %v425
        %v465 = vpack.c.b16 %v432, %v429
        %v466 = vpack.c.b16 %v433, %v430
        %v467 = vpack.c.b16 %v434, %v431
        %v468 = vpack.c.b16 %v438, %v435
        %v469 = vpack.c.b16 %v439, %v436
        %v470 = vpack.c.b16 %v440, %v437
        %v471 = vpack.c.b16 %v444, %v441
        %v472 = vpack.c.b16 %v445, %v442
        %v473 = vpack.c.b16 %v446, %v443
        %v474 = vpack.c.b16 %v450, %v447
        %v475 = vpack.c.b16 %v451, %v448
        %v476 = vpack.c.b16 %v452, %v449
        %501 = vmatprep.subr.bf16.mxu0 %v475
        %502 = vmatpush1.bf16.msra.mxu0 %v474
        %503 = vmatprep.subr.bf16.mxu0 %v472
        %504 = vmatpush1.bf16.msra.mxu0 %v471
        %505 = vmatprep.subr.bf16.mxu0 %v469
        %506 = vmatpush1.bf16.msra.mxu0 %v468
        %507 = vmatprep.subr.bf16.mxu0 %v466
        %508 = vmatpush1.bf16.msra.mxu0 %v465
        %509 = vmatprep.subr.bf16.mxu0 %v463
        %510 = vmatpush1.bf16.msra.mxu0 %v462
        %511 = vmatprep.subr.bf16.mxu0 %v460
        %512 = vmatpush1.bf16.msra.mxu0 %v459
        %513 = vmatprep.subr.bf16.mxu0 %v457
        %514 = vmatpush1.bf16.msra.mxu0 %v456
        %515 = vmatprep.subr.bf16.mxu0 %v454
        %516 = vmatpush1.bf16.msra.mxu0 %v453
        %517 = vmatprep.subr.bf16.mxu0 0
        %518 = vmatpush2.bf16.msra.mxu0 0
        %519 = vmatprep.subr.bf16.mxu0 0
        %520 = vmatpush2.bf16.msra.mxu0 0
        %521 = vmatprep.subr.bf16.mxu0 0
        %522 = vmatpush2.bf16.msra.mxu0 0
        %523 = vmatprep.subr.bf16.mxu0 0
        %524 = vmatpush2.bf16.msra.mxu0 0
        %525 = vmatprep.subr.bf16.mxu0 0
        %526 = vmatpush2.bf16.msra.mxu0 0
        %527 = vmatprep.subr.bf16.mxu0 0
        %528 = vmatpush2.bf16.msra.mxu0 0
        %529 = vmatprep.subr.bf16.mxu0 0
        %530 = vmatpush2.bf16.msra.mxu0 0
        %531 = vmatprep.subr.bf16.mxu0 0
        %532 = vmatpush2.bf16.msra.mxu0 0
        %533 = vmatprep.mubr.bf16.mxu0 0
        %534 = vmatmul.mubr.bf16.gmra.mxu0 %v322
        %v535 = vpop.f32.mrf.mxu0
        %v536 = vadd.f32 %v361, %v535
        %v537 = vpop.f32.mrf.mxu0
        %v538 = vadd.f32 %v365, %v537
        %v539 = vpop.f32.mrf.mxu0
        %v540 = vadd.f32 %v361, %v539
        %v541 = vpop.f32.mrf.mxu0
        %v542 = vadd.f32 %v365, %v541
        %543 = vmatprep.mubr.bf16.mxu0 0
        %544 = vmatmul.mubr.bf16.gmra.mxu0 %v323
        %v545 = vpop.f32.mrf.mxu0
        %v546 = vadd.f32 %v361, %v545
        %v547 = vpop.f32.mrf.mxu0
        %v548 = vadd.f32 %v365, %v547
        %v549 = vpop.f32.mrf.mxu0
        %v550 = vadd.f32 %v361, %v549
        %v551 = vpop.f32.mrf.mxu0
        %v552 = vadd.f32 %v365, %v551
        %553 = vdwg.mxu0
        %554 = vmatprep.subr.bf16.mxu0 0
        %555 = vmatpush1.bf16.msra.mxu0 %v476
        %556 = vmatprep.subr.bf16.mxu0 0
        %557 = vmatpush1.bf16.msra.mxu0 %v473
        %558 = vmatprep.subr.bf16.mxu0 0
        %559 = vmatpush1.bf16.msra.mxu0 %v470
        %560 = vmatprep.subr.bf16.mxu0 0
        %561 = vmatpush1.bf16.msra.mxu0 %v467
        %562 = vmatprep.subr.bf16.mxu0 0
        %563 = vmatpush1.bf16.msra.mxu0 %v464
        %564 = vmatprep.subr.bf16.mxu0 0
        %565 = vmatpush1.bf16.msra.mxu0 %v461
        %566 = vmatprep.subr.bf16.mxu0 0
        %567 = vmatpush1.bf16.msra.mxu0 %v458
        %568 = vmatprep.subr.bf16.mxu0 0
        %569 = vmatpush1.bf16.msra.mxu0 %v455
        %570 = vmatprep.subr.bf16.mxu0 0
        %571 = vmatpush2.bf16.msra.mxu0 0
        %572 = vmatprep.subr.bf16.mxu0 0
        %573 = vmatpush2.bf16.msra.mxu0 0
        %574 = vmatprep.subr.bf16.mxu0 0
        %575 = vmatpush2.bf16.msra.mxu0 0
        %576 = vmatprep.subr.bf16.mxu0 0
        %577 = vmatpush2.bf16.msra.mxu0 0
        %578 = vmatprep.subr.bf16.mxu0 0
        %579 = vmatpush2.bf16.msra.mxu0 0
        %580 = vmatprep.subr.bf16.mxu0 0
        %581 = vmatpush2.bf16.msra.mxu0 0
        %582 = vmatprep.subr.bf16.mxu0 0
        %583 = vmatpush2.bf16.msra.mxu0 0
        %584 = vmatprep.subr.bf16.mxu0 0
        %585 = vmatpush2.bf16.msra.mxu0 0
        %586 = vmatprep.mubr.bf16.mxu0 0
        %587 = vmatmul.mubr.bf16.gmra.mxu0 %v322
        %v588 = vpop.f32.mrf.mxu0
        %v589 = vadd.f32 %v369, %v588
        %v590 = vpop.f32.mrf.mxu0
        %v591 = vpop.f32.mrf.mxu0
        %v592 = vadd.f32 %v369, %v591
        %v593 = vpop.f32.mrf.mxu0
        %594 = vmatprep.mubr.bf16.mxu0 0
        %595 = vmatmul.mubr.bf16.gmra.mxu0 %v323
        %v596 = vpop.f32.mrf.mxu0
        %v597 = vadd.f32 %v369, %v596
        %v598 = vpop.f32.mrf.mxu0
        %v599 = vpop.f32.mrf.mxu0
        %v600 = vadd.f32 %v369, %v599
        %v601 = vpop.f32.mrf.mxu0
        %602 = vdwg.mxu0
        %v603 = vld [vmem:[#allocation7] sm:$0xf]
        %v604 = vld [vmem:[#allocation7 + $0x4] sm:$0xf]
        %v605 = vld [vmem:[#allocation7 + $0x8] sm:$0xf]
        %v606 = vld [vmem:[#allocation7 + $0xc] sm:$0xf]
        %v607 = vld [vmem:[#allocation7 + $0x10] sm:$0xf]
        %v608 = vld [vmem:[#allocation7 + $0x14] sm:$0xf]
        %v609 = vld [vmem:[#allocation7 + $0x18] sm:$0xf]
        %v610 = vld [vmem:[#allocation7 + $0x1c] sm:$0xf]
        %v611 = vld [vmem:[#allocation7 + $0x20] sm:$0xf]
        %v612 = vld [vmem:[#allocation7 + $0x24] sm:$0xf]
        %v613 = vld [vmem:[#allocation7 + $0x28] sm:$0xf]
        %v614 = vld [vmem:[#allocation7 + $0x2c] sm:$0xf]
        %v615 = vld [vmem:[#allocation7 + $0x30] sm:$0xf]
        %v616 = vld [vmem:[#allocation7 + $0x34] sm:$0xf]
        %v617 = vld [vmem:[#allocation7 + $0x38] sm:$0xf]
        %v618 = vld [vmem:[#allocation7 + $0x3c] sm:$0xf]
        %v619 = vld [vmem:[#allocation8] sm:$0xff]
        %v620 = vld [vmem:[#allocation8 + $0x8] sm:$0xff]
        %v621 = vpack.c.bf16 %v540, %v536
        %v622 = vpack.c.bf16 %v550, %v546
        %v623 = vpack.c.bf16 %v542, %v538
        %v624 = vpack.c.bf16 %v552, %v548
        %v625 = vpack.c.bf16 %v592, %v589
        %v626 = vpack.c.bf16 %v600, %v597
        %vm627 = vcmask 261120
        %v629 = vsel %vm627, %v621, 0
        %v632 = vsel %vm627, %v623, 0
        %634 = vmatprep.subr.bf16.mxu0 0
        %635 = vmatpush1.bf16.xpose.msra.mxu0 0
        %636 = vmatprep.subr.bf16.mxu0 0
        %637 = vmatpush1.bf16.xpose.msra.mxu0 0
        %638 = vmatprep.subr.bf16.mxu0 0
        %639 = vmatpush1.bf16.xpose.msra.mxu0 0
        %640 = vmatprep.subr.bf16.mxu0 0
        %641 = vmatpush1.bf16.xpose.msra.mxu0 0
        %642 = vmatprep.subr.bf16.mxu0 0
        %643 = vmatpush1.bf16.xpose.msra.mxu0 0
        %644 = vmatprep.subr.bf16.mxu0 0
        %645 = vmatpush1.bf16.xpose.msra.mxu0 0
        %646 = vmatprep.subr.bf16.mxu0 0
        %647 = vmatpush1.bf16.xpose.msra.mxu0 0
        %648 = vmatprep.subr.bf16.mxu0 0
        %649 = vmatpush1.bf16.xpose.msra.mxu0 %v632
        %650 = vmatprep.subr.bf16.mxu0 0
        %651 = vmatpush2.bf16.xpose.msra.mxu0 0
        %652 = vmatprep.subr.bf16.mxu0 0
        %653 = vmatpush2.bf16.xpose.msra.mxu0 0
        %654 = vmatprep.subr.bf16.mxu0 0
        %655 = vmatpush2.bf16.xpose.msra.mxu0 0
        %656 = vmatprep.subr.bf16.mxu0 0
        %657 = vmatpush2.bf16.xpose.msra.mxu0 0
        %658 = vmatprep.subr.bf16.mxu0 0
        %659 = vmatpush2.bf16.xpose.msra.mxu0 0
        %660 = vmatprep.subr.bf16.mxu0 0
        %661 = vmatpush2.bf16.xpose.msra.mxu0 0
        %662 = vmatprep.subr.bf16.mxu0 0
        %663 = vmatpush2.bf16.xpose.msra.mxu0 0
        %664 = vmatprep.subr.bf16.mxu0 0
        %665 = vmatpush2.bf16.xpose.msra.mxu0 0
        %666 = vmatprep.mubr.bf16.mxu0 0
        %667 = vmatmul.mubr.bf16.gmra.mxu0 %v629
        %v668 = vpop.f32.mrf.mxu0
        %v669 = vadd.f32 0.0, %v668
        %v670 = vpop.f32.mrf.mxu0
        %v671 = vpop.f32.mrf.mxu0
        %v672 = vadd.f32 0.0, %v671
        %v673 = vpop.f32.mrf.mxu0
        %674 = vdwg.mxu0
        %v676 = vsel %vm627, %v622, 0
        %v679 = vsel %vm627, %v624, 0
        %681 = vmatprep.subr.bf16.mxu0 0
        %682 = vmatpush1.bf16.xpose.msra.mxu0 0
        %683 = vmatprep.subr.bf16.mxu0 0
        %684 = vmatpush1.bf16.xpose.msra.mxu0 0
        %685 = vmatprep.subr.bf16.mxu0 0
        %686 = vmatpush1.bf16.xpose.msra.mxu0 0
        %687 = vmatprep.subr.bf16.mxu0 0
        %688 = vmatpush1.bf16.xpose.msra.mxu0 0
        %689 = vmatprep.subr.bf16.mxu0 0
        %690 = vmatpush1.bf16.xpose.msra.mxu0 0
        %691 = vmatprep.subr.bf16.mxu0 0
        %692 = vmatpush1.bf16.xpose.msra.mxu0 0
        %693 = vmatprep.subr.bf16.mxu0 0
        %694 = vmatpush1.bf16.xpose.msra.mxu0 0
        %695 = vmatprep.subr.bf16.mxu0 0
        %696 = vmatpush1.bf16.xpose.msra.mxu0 %v679
        %697 = vmatprep.subr.bf16.mxu0 0
        %698 = vmatpush2.bf16.xpose.msra.mxu0 0
        %699 = vmatprep.subr.bf16.mxu0 0
        %700 = vmatpush2.bf16.xpose.msra.mxu0 0
        %701 = vmatprep.subr.bf16.mxu0 0
        %702 = vmatpush2.bf16.xpose.msra.mxu0 0
        %703 = vmatprep.subr.bf16.mxu0 0
        %704 = vmatpush2.bf16.xpose.msra.mxu0 0
        %705 = vmatprep.subr.bf16.mxu0 0
        %706 = vmatpush2.bf16.xpose.msra.mxu0 0
        %707 = vmatprep.subr.bf16.mxu0 0
        %708 = vmatpush2.bf16.xpose.msra.mxu0 0
        %709 = vmatprep.subr.bf16.mxu0 0
        %710 = vmatpush2.bf16.xpose.msra.mxu0 0
        %711 = vmatprep.subr.bf16.mxu0 0
        %712 = vmatpush2.bf16.xpose.msra.mxu0 0
        %713 = vmatprep.mubr.bf16.mxu0 0
        %714 = vmatmul.mubr.bf16.gmra.mxu0 %v676
        %v715 = vpop.f32.mrf.mxu0
        %v716 = vadd.f32 0.0, %v715
        %v717 = vpop.f32.mrf.mxu0
        %v718 = vpop.f32.mrf.mxu0
        %v719 = vadd.f32 0.0, %v718
        %v720 = vpop.f32.mrf.mxu0
        %721 = vdwg.mxu0
        %v722 = vmul.f32 %v669, 0.17677669
        %v723 = vmul.f32 %v672, 0.17677669
        %v724 = vmul.f32 %v716, 0.17677669
        %v725 = vmul.f32 %v719, 0.17677669
        %v726 = vadd.f32 %v722, %v619
        %v727 = vadd.f32 %v723, %v620
        %v728 = vadd.f32 %v724, %v619
        %v729 = vadd.f32 %v725, %v620
        %vm730 = vcmask 130048
        %v731 = vsel %vm730, %v726, -inf
        %732 = vmax.xlane.f32.xlu0 %v731
        %v733 = vpop.xlane.xlu0 %732
        %v734 = vsel %vm730, %v727, -inf
        %735 = vmax.xlane.f32.xlu0 %v734
        %v736 = vpop.xlane.xlu0 %735
        %v737 = vsel %vm730, %v728, -inf
        %738 = vmax.xlane.f32.xlu0 %v737
        %v739 = vpop.xlane.xlu0 %738
        %v740 = vsel %vm730, %v729, -inf
        %741 = vmax.xlane.f32.xlu0 %v740
        %v742 = vpop.xlane.xlu0 %741
        %v743 = vsub.f32 %v726, %v733
        %v744 = vsub.f32 %v727, %v736
        %v745 = vsub.f32 %v728, %v739
        %v746 = vsub.f32 %v729, %v742
        %v747 = vmul.f32 %v743, 1.442695
        %v748 = vpow.pop %v747
        %v749 = vmul.f32 %v744, 1.442695
        %v750 = vpow.pop %v749
        %v751 = vmul.f32 %v745, 1.442695
        %v752 = vpow.pop %v751
        %v753 = vmul.f32 %v746, 1.442695
        %v754 = vpow.pop %v753
        %v755 = vsel %vm730, %v748, 0.0
        %756 = vadd.xlane.f32.xlu0 %v755
        %v757 = vpop.xlane.xlu0 %756
        %v758 = vsel %vm730, %v750, 0.0
        %759 = vadd.xlane.f32.xlu0 %v758
        %v760 = vpop.xlane.xlu0 %759
        %v761 = vsel %vm730, %v752, 0.0
        %762 = vadd.xlane.f32.xlu0 %v761
        %v763 = vpop.xlane.xlu0 %762
        %v764 = vsel %vm730, %v754, 0.0
        %765 = vadd.xlane.f32.xlu0 %v764
        %v766 = vpop.xlane.xlu0 %765
        %v767 = vrcp.pop %v757
        %v768 = vrcp.pop %v760
        %v769 = vrcp.pop %v763
        %v770 = vrcp.pop %v766
        %v771 = vmul.f32 %v748, %v767
        %v772 = vmul.f32 %v750, %v768
        %v773 = vmul.f32 %v752, %v769
        %v774 = vmul.f32 %v754, %v770
        %v775 = vpack.c.bf16 %v772, %v771
        %v776 = vpack.c.bf16 %v774, %v773
        %v778 = vsel %vm730, %v775, 0
        %780 = vmatprep.subr.bf16.mxu0 0
        %781 = vmatpush1.bf16.msra.mxu0 0
        %782 = vmatprep.subr.bf16.mxu0 0
        %783 = vmatpush1.bf16.msra.mxu0 0
        %784 = vmatprep.subr.bf16.mxu0 0
        %785 = vmatpush1.bf16.msra.mxu0 0
        %786 = vmatprep.subr.bf16.mxu0 0
        %787 = vmatpush1.bf16.msra.mxu0 0
        %788 = vmatprep.subr.bf16.mxu0 0
        %789 = vmatpush1.bf16.msra.mxu0 0
        %790 = vmatprep.subr.bf16.mxu0 0
        %791 = vmatpush1.bf16.msra.mxu0 0
        %792 = vmatprep.subr.bf16.mxu0 0
        %793 = vmatpush1.bf16.msra.mxu0 0
        %794 = vmatprep.subr.bf16.mxu0 0
        %795 = vmatpush1.bf16.msra.mxu0 %v625
        %796 = vmatprep.subr.bf16.mxu0 0
        %797 = vmatpush2.bf16.msra.mxu0 0
        %798 = vmatprep.subr.bf16.mxu0 0
        %799 = vmatpush2.bf16.msra.mxu0 0
        %800 = vmatprep.subr.bf16.mxu0 0
        %801 = vmatpush2.bf16.msra.mxu0 0
        %802 = vmatprep.subr.bf16.mxu0 0
        %803 = vmatpush2.bf16.msra.mxu0 0
        %804 = vmatprep.subr.bf16.mxu0 0
        %805 = vmatpush2.bf16.msra.mxu0 0
        %806 = vmatprep.subr.bf16.mxu0 0
        %807 = vmatpush2.bf16.msra.mxu0 0
        %808 = vmatprep.subr.bf16.mxu0 0
        %809 = vmatpush2.bf16.msra.mxu0 0
        %810 = vmatprep.subr.bf16.mxu0 0
        %811 = vmatpush2.bf16.msra.mxu0 0
        %812 = vmatprep.mubr.bf16.mxu0 0
        %813 = vmatmul.mubr.bf16.gmra.mxu0 %v778
        %v814 = vpop.f32.mrf.mxu0
        %v815 = vadd.f32 0.0, %v814
        %v816 = vpop.f32.mrf.mxu0
        %v817 = vpop.f32.mrf.mxu0
        %v818 = vadd.f32 0.0, %v817
        %v819 = vpop.f32.mrf.mxu0
        %820 = vdwg.mxu0
        %v822 = vsel %vm730, %v776, 0
        %824 = vmatprep.subr.bf16.mxu0 0
        %825 = vmatpush1.bf16.msra.mxu0 0
        %826 = vmatprep.subr.bf16.mxu0 0
        %827 = vmatpush1.bf16.msra.mxu0 0
        %828 = vmatprep.subr.bf16.mxu0 0
        %829 = vmatpush1.bf16.msra.mxu0 0
        %830 = vmatprep.subr.bf16.mxu0 0
        %831 = vmatpush1.bf16.msra.mxu0 0
        %832 = vmatprep.subr.bf16.mxu0 0
        %833 = vmatpush1.bf16.msra.mxu0 0
        %834 = vmatprep.subr.bf16.mxu0 0
        %835 = vmatpush1.bf16.msra.mxu0 0
        %836 = vmatprep.subr.bf16.mxu0 0
        %837 = vmatpush1.bf16.msra.mxu0 0
        %838 = vmatprep.subr.bf16.mxu0 0
        %839 = vmatpush1.bf16.msra.mxu0 %v626
        %840 = vmatprep.subr.bf16.mxu0 0
        %841 = vmatpush2.bf16.msra.mxu0 0
        %842 = vmatprep.subr.bf16.mxu0 0
        %843 = vmatpush2.bf16.msra.mxu0 0
        %844 = vmatprep.subr.bf16.mxu0 0
        %845 = vmatpush2.bf16.msra.mxu0 0
        %846 = vmatprep.subr.bf16.mxu0 0
        %847 = vmatpush2.bf16.msra.mxu0 0
        %848 = vmatprep.subr.bf16.mxu0 0
        %849 = vmatpush2.bf16.msra.mxu0 0
        %850 = vmatprep.subr.bf16.mxu0 0
        %851 = vmatpush2.bf16.msra.mxu0 0
        %852 = vmatprep.subr.bf16.mxu0 0
        %853 = vmatpush2.bf16.msra.mxu0 0
        %854 = vmatprep.subr.bf16.mxu0 0
        %855 = vmatpush2.bf16.msra.mxu0 0
        %856 = vmatprep.mubr.bf16.mxu0 0
        %857 = vmatmul.mubr.bf16.gmra.mxu0 %v822
        %v858 = vpop.f32.mrf.mxu0
        %v859 = vadd.f32 0.0, %v858
        %v860 = vpop.f32.mrf.mxu0
        %v861 = vpop.f32.mrf.mxu0
        %v862 = vadd.f32 0.0, %v861
        %v863 = vpop.f32.mrf.mxu0
        %864 = vdwg.mxu0
        %v865 = vpack.c.bf16 %v818, %v815
        %v866 = vpack.c.bf16 %v862, %v859
        %868 = vrot.lane.b32.xlu0 %v621, 96
        %v869 = vpop.permute.xlu0 %868
        %871 = vrot.lane.b32.xlu0 %v623, 96
        %v872 = vpop.permute.xlu0 %871
        %v874 = vsel %vm627, %v869, 0
        %v877 = vsel %vm627, %v872, 0
        %879 = vmatprep.subr.bf16.mxu0 0
        %880 = vmatpush1.bf16.xpose.msra.mxu0 0
        %881 = vmatprep.subr.bf16.mxu0 0
        %882 = vmatpush1.bf16.xpose.msra.mxu0 0
        %883 = vmatprep.subr.bf16.mxu0 0
        %884 = vmatpush1.bf16.xpose.msra.mxu0 0
        %885 = vmatprep.subr.bf16.mxu0 0
        %886 = vmatpush1.bf16.xpose.msra.mxu0 0
        %887 = vmatprep.subr.bf16.mxu0 0
        %888 = vmatpush1.bf16.xpose.msra.mxu0 0
        %889 = vmatprep.subr.bf16.mxu0 0
        %890 = vmatpush1.bf16.xpose.msra.mxu0 0
        %891 = vmatprep.subr.bf16.mxu0 0
        %892 = vmatpush1.bf16.xpose.msra.mxu0 0
        %893 = vmatprep.subr.bf16.mxu0 0
        %894 = vmatpush1.bf16.xpose.msra.mxu0 %v877
        %895 = vmatprep.subr.bf16.mxu0 0
        %896 = vmatpush2.bf16.xpose.msra.mxu0 0
        %897 = vmatprep.subr.bf16.mxu0 0
        %898 = vmatpush2.bf16.xpose.msra.mxu0 0
        %899 = vmatprep.subr.bf16.mxu0 0
        %900 = vmatpush2.bf16.xpose.msra.mxu0 0
        %901 = vmatprep.subr.bf16.mxu0 0
        %902 = vmatpush2.bf16.xpose.msra.mxu0 0
        %903 = vmatprep.subr.bf16.mxu0 0
        %904 = vmatpush2.bf16.xpose.msra.mxu0 0
        %905 = vmatprep.subr.bf16.mxu0 0
        %906 = vmatpush2.bf16.xpose.msra.mxu0 0
        %907 = vmatprep.subr.bf16.mxu0 0
        %908 = vmatpush2.bf16.xpose.msra.mxu0 0
        %909 = vmatprep.subr.bf16.mxu0 0
        %910 = vmatpush2.bf16.xpose.msra.mxu0 0
        %911 = vmatprep.mubr.bf16.mxu0 0
        %912 = vmatmul.mubr.bf16.gmra.mxu0 %v874
        %v913 = vpop.f32.mrf.mxu0
        %v914 = vadd.f32 0.0, %v913
        %v915 = vpop.f32.mrf.mxu0
        %v916 = vpop.f32.mrf.mxu0
        %v917 = vadd.f32 0.0, %v916
        %v918 = vpop.f32.mrf.mxu0
        %919 = vdwg.mxu0
        %921 = vrot.lane.b32.xlu0 %v622, 96
        %v922 = vpop.permute.xlu0 %921
        %924 = vrot.lane.b32.xlu0 %v624, 96
        %v925 = vpop.permute.xlu0 %924
        %v927 = vsel %vm627, %v922, 0
        %v930 = vsel %vm627, %v925, 0
        %932 = vmatprep.subr.bf16.mxu0 0
        %933 = vmatpush1.bf16.xpose.msra.mxu0 0
        %934 = vmatprep.subr.bf16.mxu0 0
        %935 = vmatpush1.bf16.xpose.msra.mxu0 0
        %936 = vmatprep.subr.bf16.mxu0 0
        %937 = vmatpush1.bf16.xpose.msra.mxu0 0
        %938 = vmatprep.subr.bf16.mxu0 0
        %939 = vmatpush1.bf16.xpose.msra.mxu0 0
        %940 = vmatprep.subr.bf16.mxu0 0
        %941 = vmatpush1.bf16.xpose.msra.mxu0 0
        %942 = vmatprep.subr.bf16.mxu0 0
        %943 = vmatpush1.bf16.xpose.msra.mxu0 0
        %944 = vmatprep.subr.bf16.mxu0 0
        %945 = vmatpush1.bf16.xpose.msra.mxu0 0
        %946 = vmatprep.subr.bf16.mxu0 0
        %947 = vmatpush1.bf16.xpose.msra.mxu0 %v930
        %948 = vmatprep.subr.bf16.mxu0 0
        %949 = vmatpush2.bf16.xpose.msra.mxu0 0
        %950 = vmatprep.subr.bf16.mxu0 0
        %951 = vmatpush2.bf16.xpose.msra.mxu0 0
        %952 = vmatprep.subr.bf16.mxu0 0
        %953 = vmatpush2.bf16.xpose.msra.mxu0 0
        %954 = vmatprep.subr.bf16.mxu0 0
        %955 = vmatpush2.bf16.xpose.msra.mxu0 0
        %956 = vmatprep.subr.bf16.mxu0 0
        %957 = vmatpush2.bf16.xpose.msra.mxu0 0
        %958 = vmatprep.subr.bf16.mxu0 0
        %959 = vmatpush2.bf16.xpose.msra.mxu0 0
        %960 = vmatprep.subr.bf16.mxu0 0
        %961 = vmatpush2.bf16.xpose.msra.mxu0 0
        %962 = vmatprep.subr.bf16.mxu0 0
        %963 = vmatpush2.bf16.xpose.msra.mxu0 0
        %964 = vmatprep.mubr.bf16.mxu0 0
        %965 = vmatmul.mubr.bf16.gmra.mxu0 %v927
        %v966 = vpop.f32.mrf.mxu0
        %v967 = vadd.f32 0.0, %v966
        %v968 = vpop.f32.mrf.mxu0
        %v969 = vpop.f32.mrf.mxu0
        %v970 = vadd.f32 0.0, %v969
        %v971 = vpop.f32.mrf.mxu0
        %972 = vdwg.mxu0
        %v973 = vmul.f32 %v914, 0.17677669
        %v974 = vmul.f32 %v917, 0.17677669
        %v975 = vmul.f32 %v967, 0.17677669
        %v976 = vmul.f32 %v970, 0.17677669
        %v977 = vadd.f32 %v973, %v619
        %v978 = vadd.f32 %v974, %v620
        %v979 = vadd.f32 %v975, %v619
        %v980 = vadd.f32 %v976, %v620
        %v981 = vsel %vm730, %v977, -inf
        %982 = vmax.xlane.f32.xlu0 %v981
        %v983 = vpop.xlane.xlu0 %982
        %v984 = vsel %vm730, %v978, -inf
        %985 = vmax.xlane.f32.xlu0 %v984
        %v986 = vpop.xlane.xlu0 %985
        %v987 = vsel %vm730, %v979, -inf
        %988 = vmax.xlane.f32.xlu0 %v987
        %v989 = vpop.xlane.xlu0 %988
        %v990 = vsel %vm730, %v980, -inf
        %991 = vmax.xlane.f32.xlu0 %v990
        %v992 = vpop.xlane.xlu0 %991
        %v993 = vsub.f32 %v977, %v983
        %v994 = vsub.f32 %v978, %v986
        %v995 = vsub.f32 %v979, %v989
        %v996 = vsub.f32 %v980, %v992
        %v997 = vmul.f32 %v993, 1.442695
        %v998 = vpow.pop %v997
        %v999 = vmul.f32 %v994, 1.442695
        %v1000 = vpow.pop %v999
        %v1001 = vmul.f32 %v995, 1.442695
        %v1002 = vpow.pop %v1001
        %v1003 = vmul.f32 %v996, 1.442695
        %v1004 = vpow.pop %v1003
        %v1005 = vsel %vm730, %v998, 0.0
        %1006 = vadd.xlane.f32.xlu0 %v1005
        %v1007 = vpop.xlane.xlu0 %1006
        %v1008 = vsel %vm730, %v1000, 0.0
        %1009 = vadd.xlane.f32.xlu0 %v1008
        %v1010 = vpop.xlane.xlu0 %1009
        %v1011 = vsel %vm730, %v1002, 0.0
        %1012 = vadd.xlane.f32.xlu0 %v1011
        %v1013 = vpop.xlane.xlu0 %1012
        %v1014 = vsel %vm730, %v1004, 0.0
        %1015 = vadd.xlane.f32.xlu0 %v1014
        %v1016 = vpop.xlane.xlu0 %1015
        %v1017 = vrcp.pop %v1007
        %v1018 = vrcp.pop %v1010
        %v1019 = vrcp.pop %v1013
        %v1020 = vrcp.pop %v1016
        %v1021 = vmul.f32 %v998, %v1017
        %v1022 = vmul.f32 %v1000, %v1018
        %v1023 = vmul.f32 %v1002, %v1019
        %v1024 = vmul.f32 %v1004, %v1020
        %v1025 = vpack.c.bf16 %v1022, %v1021
        %v1026 = vpack.c.bf16 %v1024, %v1023
        %1028 = vrot.lane.b32.xlu0 %v625, 96
        %v1029 = vpop.permute.xlu0 %1028
        %v1032 = vsel %vm730, %v1025, 0
        %1034 = vmatprep.subr.bf16.mxu0 0
        %1035 = vmatpush1.bf16.msra.mxu0 0
        %1036 = vmatprep.subr.bf16.mxu0 0
        %1037 = vmatpush1.bf16.msra.mxu0 0
        %1038 = vmatprep.subr.bf16.mxu0 0
        %1039 = vmatpush1.bf16.msra.mxu0 0
        %1040 = vmatprep.subr.bf16.mxu0 0
        %1041 = vmatpush1.bf16.msra.mxu0 0
        %1042 = vmatprep.subr.bf16.mxu0 0
        %1043 = vmatpush1.bf16.msra.mxu0 0
        %1044 = vmatprep.subr.bf16.mxu0 0
        %1045 = vmatpush1.bf16.msra.mxu0 0
        %1046 = vmatprep.subr.bf16.mxu0 0
        %1047 = vmatpush1.bf16.msra.mxu0 0
        %1048 = vmatprep.subr.bf16.mxu0 0
        %1049 = vmatpush1.bf16.msra.mxu0 %v1029
        %1050 = vmatprep.subr.bf16.mxu0 0
        %1051 = vmatpush2.bf16.msra.mxu0 0
        %1052 = vmatprep.subr.bf16.mxu0 0
        %1053 = vmatpush2.bf16.msra.mxu0 0
        %1054 = vmatprep.subr.bf16.mxu0 0
        %1055 = vmatpush2.bf16.msra.mxu0 0
        %1056 = vmatprep.subr.bf16.mxu0 0
        %1057 = vmatpush2.bf16.msra.mxu0 0
        %1058 = vmatprep.subr.bf16.mxu0 0
        %1059 = vmatpush2.bf16.msra.mxu0 0
        %1060 = vmatprep.subr.bf16.mxu0 0
        %1061 = vmatpush2.bf16.msra.mxu0 0
        %1062 = vmatprep.subr.bf16.mxu0 0
        %1063 = vmatpush2.bf16.msra.mxu0 0
        %1064 = vmatprep.subr.bf16.mxu0 0
        %1065 = vmatpush2.bf16.msra.mxu0 0
        %1066 = vmatprep.mubr.bf16.mxu0 0
        %1067 = vmatmul.mubr.bf16.gmra.mxu0 %v1032
        %v1068 = vpop.f32.mrf.mxu0
        %v1069 = vadd.f32 0.0, %v1068
        %v1070 = vpop.f32.mrf.mxu0
        %v1071 = vpop.f32.mrf.mxu0
        %v1072 = vadd.f32 0.0, %v1071
        %v1073 = vpop.f32.mrf.mxu0
        %1074 = vdwg.mxu0
        %1076 = vrot.lane.b32.xlu0 %v626, 96
        %v1077 = vpop.permute.xlu0 %1076
        %v1080 = vsel %vm730, %v1026, 0
        %1082 = vmatprep.subr.bf16.mxu0 0
        %1083 = vmatpush1.bf16.msra.mxu0 0
        %1084 = vmatprep.subr.bf16.mxu0 0
        %1085 = vmatpush1.bf16.msra.mxu0 0
        %1086 = vmatprep.subr.bf16.mxu0 0
        %1087 = vmatpush1.bf16.msra.mxu0 0
        %1088 = vmatprep.subr.bf16.mxu0 0
        %1089 = vmatpush1.bf16.msra.mxu0 0
        %1090 = vmatprep.subr.bf16.mxu0 0
        %1091 = vmatpush1.bf16.msra.mxu0 0
        %1092 = vmatprep.subr.bf16.mxu0 0
        %1093 = vmatpush1.bf16.msra.mxu0 0
        %1094 = vmatprep.subr.bf16.mxu0 0
        %1095 = vmatpush1.bf16.msra.mxu0 0
        %1096 = vmatprep.subr.bf16.mxu0 0
        %1097 = vmatpush1.bf16.msra.mxu0 %v1077
        %1098 = vmatprep.subr.bf16.mxu0 0
        %1099 = vmatpush2.bf16.msra.mxu0 0
        %1100 = vmatprep.subr.bf16.mxu0 0
        %1101 = vmatpush2.bf16.msra.mxu0 0
        %1102 = vmatprep.subr.bf16.mxu0 0
        %1103 = vmatpush2.bf16.msra.mxu0 0
        %1104 = vmatprep.subr.bf16.mxu0 0
        %1105 = vmatpush2.bf16.msra.mxu0 0
        %1106 = vmatprep.subr.bf16.mxu0 0
        %1107 = vmatpush2.bf16.msra.mxu0 0
        %1108 = vmatprep.subr.bf16.mxu0 0
        %1109 = vmatpush2.bf16.msra.mxu0 0
        %1110 = vmatprep.subr.bf16.mxu0 0
        %1111 = vmatpush2.bf16.msra.mxu0 0
        %1112 = vmatprep.subr.bf16.mxu0 0
        %1113 = vmatpush2.bf16.msra.mxu0 0
        %1114 = vmatprep.mubr.bf16.mxu0 0
        %1115 = vmatmul.mubr.bf16.gmra.mxu0 %v1080
        %v1116 = vpop.f32.mrf.mxu0
        %v1117 = vadd.f32 0.0, %v1116
        %v1118 = vpop.f32.mrf.mxu0
        %v1119 = vpop.f32.mrf.mxu0
        %v1120 = vadd.f32 0.0, %v1119
        %v1121 = vpop.f32.mrf.mxu0
        %1122 = vdwg.mxu0
        %v1123 = vpack.c.bf16 %v1072, %v1069
        %v1124 = vpack.c.bf16 %v1120, %v1117
        %v1129 = vunpack.c.l.b16 %v607
        %v1130 = vunpack.c.l.b16 %v608
        %v1131 = vunpack.c.l.b16 %v609
        %v1132 = vunpack.c.l.b16 %v610
        %v1133 = vpack.c.b16 %v1130, %v1129
        %v1134 = vpack.c.b16 %v1132, %v1131
        %v1138 = vsel %vm627, %v1123, 0
        %v1141 = vsel %vm627, %v1124, 0
        %1143 = vmatprep.subr.bf16.mxu0 0
        %1144 = vmatpush1.bf16.msra.mxu0 0
        %1145 = vmatprep.subr.bf16.mxu0 0
        %1146 = vmatpush1.bf16.msra.mxu0 0
        %1147 = vmatprep.subr.bf16.mxu0 0
        %1148 = vmatpush1.bf16.msra.mxu0 0
        %1149 = vmatprep.subr.bf16.mxu0 0
        %1150 = vmatpush1.bf16.msra.mxu0 0
        %1151 = vmatprep.subr.bf16.mxu0 0
        %1152 = vmatpush1.bf16.msra.mxu0 0
        %1153 = vmatprep.subr.bf16.mxu0 0
        %1154 = vmatpush1.bf16.msra.mxu0 0
        %1155 = vmatprep.subr.bf16.mxu0 0
        %1156 = vmatpush1.bf16.msra.mxu0 %v1134
        %1157 = vmatprep.subr.bf16.mxu0 0
        %1158 = vmatpush1.bf16.msra.mxu0 %v1133
        %1159 = vmatprep.subr.bf16.mxu0 0
        %1160 = vmatpush2.bf16.msra.mxu0 0
        %1161 = vmatprep.subr.bf16.mxu0 0
        %1162 = vmatpush2.bf16.msra.mxu0 0
        %1163 = vmatprep.subr.bf16.mxu0 0
        %1164 = vmatpush2.bf16.msra.mxu0 0
        %1165 = vmatprep.subr.bf16.mxu0 0
        %1166 = vmatpush2.bf16.msra.mxu0 0
        %1167 = vmatprep.subr.bf16.mxu0 0
        %1168 = vmatpush2.bf16.msra.mxu0 0
        %1169 = vmatprep.subr.bf16.mxu0 0
        %1170 = vmatpush2.bf16.msra.mxu0 0
        %1171 = vmatprep.subr.bf16.mxu0 0
        %1172 = vmatpush2.bf16.msra.mxu0 0
        %1173 = vmatprep.subr.bf16.mxu0 0
        %1174 = vmatpush2.bf16.msra.mxu0 0
        %1175 = vmatprep.mubr.bf16.mxu0 0
        %1176 = vmatmul.mubr.bf16.gmra.mxu0 %v1138
        %v1177 = vpop.f32.mrf.mxu0
        %v1178 = vadd.f32 0.0, %v1177
        %v1179 = vpop.f32.mrf.mxu0
        %v1180 = vpop.f32.mrf.mxu0
        %v1181 = vadd.f32 0.0, %v1180
        %v1182 = vpop.f32.mrf.mxu0
        %1183 = vmatprep.mubr.bf16.mxu0 0
        %1184 = vmatmul.mubr.bf16.gmra.mxu0 %v1141
        %v1185 = vpop.f32.mrf.mxu0
        %v1186 = vadd.f32 0.0, %v1185
        %v1187 = vpop.f32.mrf.mxu0
        %v1188 = vpop.f32.mrf.mxu0
        %v1189 = vadd.f32 0.0, %v1188
        %v1190 = vpop.f32.mrf.mxu0
        %1191 = vdwg.mxu0
        %v1196 = vunpack.c.l.b16 %v603
        %v1197 = vunpack.c.l.b16 %v604
        %v1198 = vunpack.c.l.b16 %v605
        %v1199 = vunpack.c.l.b16 %v606
        %v1200 = vpack.c.b16 %v1197, %v1196
        %v1201 = vpack.c.b16 %v1199, %v1198
        %v1205 = vsel %vm627, %v865, 0
        %v1208 = vsel %vm627, %v866, 0
        %1210 = vmatprep.subr.bf16.mxu0 0
        %1211 = vmatpush1.bf16.msra.mxu0 0
        %1212 = vmatprep.subr.bf16.mxu0 0
        %1213 = vmatpush1.bf16.msra.mxu0 0
        %1214 = vmatprep.subr.bf16.mxu0 0
        %1215 = vmatpush1.bf16.msra.mxu0 0
        %1216 = vmatprep.subr.bf16.mxu0 0
        %1217 = vmatpush1.bf16.msra.mxu0 0
        %1218 = vmatprep.subr.bf16.mxu0 0
        %1219 = vmatpush1.bf16.msra.mxu0 0
        %1220 = vmatprep.subr.bf16.mxu0 0
        %1221 = vmatpush1.bf16.msra.mxu0 0
        %1222 = vmatprep.subr.bf16.mxu0 0
        %1223 = vmatpush1.bf16.msra.mxu0 %v1201
        %1224 = vmatprep.subr.bf16.mxu0 0
        %1225 = vmatpush1.bf16.msra.mxu0 %v1200
        %1226 = vmatprep.subr.bf16.mxu0 0
        %1227 = vmatpush2.bf16.msra.mxu0 0
        %1228 = vmatprep.subr.bf16.mxu0 0
        %1229 = vmatpush2.bf16.msra.mxu0 0
        %1230 = vmatprep.subr.bf16.mxu0 0
        %1231 = vmatpush2.bf16.msra.mxu0 0
        %1232 = vmatprep.subr.bf16.mxu0 0
        %1233 = vmatpush2.bf16.msra.mxu0 0
        %1234 = vmatprep.subr.bf16.mxu0 0
        %1235 = vmatpush2.bf16.msra.mxu0 0
        %1236 = vmatprep.subr.bf16.mxu0 0
        %1237 = vmatpush2.bf16.msra.mxu0 0
        %1238 = vmatprep.subr.bf16.mxu0 0
        %1239 = vmatpush2.bf16.msra.mxu0 0
        %1240 = vmatprep.subr.bf16.mxu0 0
        %1241 = vmatpush2.bf16.msra.mxu0 0
        %1242 = vmatprep.mubr.bf16.mxu0 0
        %1243 = vmatmul.mubr.bf16.gmra.mxu0 %v1205
        %v1244 = vpop.f32.mrf.mxu0
        %v1245 = vadd.f32 %v1178, %v1244
        %v1246 = vpop.f32.mrf.mxu0
        %v1247 = vpop.f32.mrf.mxu0
        %v1248 = vadd.f32 %v1181, %v1247
        %v1249 = vpop.f32.mrf.mxu0
        %1250 = vmatprep.mubr.bf16.mxu0 0
        %1251 = vmatmul.mubr.bf16.gmra.mxu0 %v1208
        %v1252 = vpop.f32.mrf.mxu0
        %v1253 = vadd.f32 %v1186, %v1252
        %v1254 = vpop.f32.mrf.mxu0
        %v1255 = vpop.f32.mrf.mxu0
        %v1256 = vadd.f32 %v1189, %v1255
        %v1257 = vpop.f32.mrf.mxu0
        %1258 = vdwg.mxu0
        %1259 = vrot.lane.b32.xlu0 %v621, 64
        %v1260 = vpop.permute.xlu0 %1259
        %1261 = vrot.lane.b32.xlu0 %v623, 64
        %v1262 = vpop.permute.xlu0 %1261
        %v1264 = vsel %vm627, %v1260, 0
        %v1267 = vsel %vm627, %v1262, 0
        %1269 = vmatprep.subr.bf16.mxu0 0
        %1270 = vmatpush1.bf16.xpose.msra.mxu0 0
        %1271 = vmatprep.subr.bf16.mxu0 0
        %1272 = vmatpush1.bf16.xpose.msra.mxu0 0
        %1273 = vmatprep.subr.bf16.mxu0 0
        %1274 = vmatpush1.bf16.xpose.msra.mxu0 0
        %1275 = vmatprep.subr.bf16.mxu0 0
        %1276 = vmatpush1.bf16.xpose.msra.mxu0 0
        %1277 = vmatprep.subr.bf16.mxu0 0
        %1278 = vmatpush1.bf16.xpose.msra.mxu0 0
        %1279 = vmatprep.subr.bf16.mxu0 0
        %1280 = vmatpush1.bf16.xpose.msra.mxu0 0
        %1281 = vmatprep.subr.bf16.mxu0 0
        %1282 = vmatpush1.bf16.xpose.msra.mxu0 0
        %1283 = vmatprep.subr.bf16.mxu0 0
        %1284 = vmatpush1.bf16.xpose.msra.mxu0 %v1267
        %1285 = vmatprep.subr.bf16.mxu0 0
        %1286 = vmatpush2.bf16.xpose.msra.mxu0 0
        %1287 = vmatprep.subr.bf16.mxu0 0
        %1288 = vmatpush2.bf16.xpose.msra.mxu0 0
        %1289 = vmatprep.subr.bf16.mxu0 0
        %1290 = vmatpush2.bf16.xpose.msra.mxu0 0
        %1291 = vmatprep.subr.bf16.mxu0 0
        %1292 = vmatpush2.bf16.xpose.msra.mxu0 0
        %1293 = vmatprep.subr.bf16.mxu0 0
        %1294 = vmatpush2.bf16.xpose.msra.mxu0 0
        %1295 = vmatprep.subr.bf16.mxu0 0
        %1296 = vmatpush2.bf16.xpose.msra.mxu0 0
        %1297 = vmatprep.subr.bf16.mxu0 0
        %1298 = vmatpush2.bf16.xpose.msra.mxu0 0
        %1299 = vmatprep.subr.bf16.mxu0 0
        %1300 = vmatpush2.bf16.xpose.msra.mxu0 0
        %1301 = vmatprep.mubr.bf16.mxu0 0
        %1302 = vmatmul.mubr.bf16.gmra.mxu0 %v1264
        %v1303 = vpop.f32.mrf.mxu0
        %v1304 = vadd.f32 0.0, %v1303
        %v1305 = vpop.f32.mrf.mxu0
        %v1306 = vpop.f32.mrf.mxu0
        %v1307 = vadd.f32 0.0, %v1306
        %v1308 = vpop.f32.mrf.mxu0
        %1309 = vdwg.mxu0
        %1310 = vrot.lane.b32.xlu0 %v622, 64
        %v1311 = vpop.permute.xlu0 %1310
        %1312 = vrot.lane.b32.xlu0 %v624, 64
        %v1313 = vpop.permute.xlu0 %1312
        %v1315 = vsel %vm627, %v1311, 0
        %v1318 = vsel %vm627, %v1313, 0
        %1320 = vmatprep.subr.bf16.mxu0 0
        %1321 = vmatpush1.bf16.xpose.msra.mxu0 0
        %1322 = vmatprep.subr.bf16.mxu0 0
        %1323 = vmatpush1.bf16.xpose.msra.mxu0 0
        %1324 = vmatprep.subr.bf16.mxu0 0
        %1325 = vmatpush1.bf16.xpose.msra.mxu0 0
        %1326 = vmatprep.subr.bf16.mxu0 0
        %1327 = vmatpush1.bf16.xpose.msra.mxu0 0
        %1328 = vmatprep.subr.bf16.mxu0 0
        %1329 = vmatpush1.bf16.xpose.msra.mxu0 0
        %1330 = vmatprep.subr.bf16.mxu0 0
        %1331 = vmatpush1.bf16.xpose.msra.mxu0 0
        %1332 = vmatprep.subr.bf16.mxu0 0
        %1333 = vmatpush1.bf16.xpose.msra.mxu0 0
        %1334 = vmatprep.subr.bf16.mxu0 0
        %1335 = vmatpush1.bf16.xpose.msra.mxu0 %v1318
        %1336 = vmatprep.subr.bf16.mxu0 0
        %1337 = vmatpush2.bf16.xpose.msra.mxu0 0
        %1338 = vmatprep.subr.bf16.mxu0 0
        %1339 = vmatpush2.bf16.xpose.msra.mxu0 0
        %1340 = vmatprep.subr.bf16.mxu0 0
        %1341 = vmatpush2.bf16.xpose.msra.mxu0 0
        %1342 = vmatprep.subr.bf16.mxu0 0
        %1343 = vmatpush2.bf16.xpose.msra.mxu0 0
        %1344 = vmatprep.subr.bf16.mxu0 0
        %1345 = vmatpush2.bf16.xpose.msra.mxu0 0
        %1346 = vmatprep.subr.bf16.mxu0 0
        %1347 = vmatpush2.bf16.xpose.msra.mxu0 0
        %1348 = vmatprep.subr.bf16.mxu0 0
        %1349 = vmatpush2.bf16.xpose.msra.mxu0 0
        %1350 = vmatprep.subr.bf16.mxu0 0
        %1351 = vmatpush2.bf16.xpose.msra.mxu0 0
        %1352 = vmatprep.mubr.bf16.mxu0 0
        %1353 = vmatmul.mubr.bf16.gmra.mxu0 %v1315
        %v1354 = vpop.f32.mrf.mxu0
        %v1355 = vadd.f32 0.0, %v1354
        %v1356 = vpop.f32.mrf.mxu0
        %v1357 = vpop.f32.mrf.mxu0
        %v1358 = vadd.f32 0.0, %v1357
        %v1359 = vpop.f32.mrf.mxu0
        %1360 = vdwg.mxu0
        %v1361 = vmul.f32 %v1304, 0.17677669
        %v1362 = vmul.f32 %v1307, 0.17677669
        %v1363 = vmul.f32 %v1355, 0.17677669
        %v1364 = vmul.f32 %v1358, 0.17677669
        %v1365 = vadd.f32 %v1361, %v619
        %v1366 = vadd.f32 %v1362, %v620
        %v1367 = vadd.f32 %v1363, %v619
        %v1368 = vadd.f32 %v1364, %v620
        %v1369 = vsel %vm730, %v1365, -inf
        %1370 = vmax.xlane.f32.xlu0 %v1369
        %v1371 = vpop.xlane.xlu0 %1370
        %v1372 = vsel %vm730, %v1366, -inf
        %1373 = vmax.xlane.f32.xlu0 %v1372
        %v1374 = vpop.xlane.xlu0 %1373
        %v1375 = vsel %vm730, %v1367, -inf
        %1376 = vmax.xlane.f32.xlu0 %v1375
        %v1377 = vpop.xlane.xlu0 %1376
        %v1378 = vsel %vm730, %v1368, -inf
        %1379 = vmax.xlane.f32.xlu0 %v1378
        %v1380 = vpop.xlane.xlu0 %1379
        %v1381 = vsub.f32 %v1365, %v1371
        %v1382 = vsub.f32 %v1366, %v1374
        %v1383 = vsub.f32 %v1367, %v1377
        %v1384 = vsub.f32 %v1368, %v1380
        %v1385 = vmul.f32 %v1381, 1.442695
        %v1386 = vpow.pop %v1385
        %v1387 = vmul.f32 %v1382, 1.442695
        %v1388 = vpow.pop %v1387
        %v1389 = vmul.f32 %v1383, 1.442695
        %v1390 = vpow.pop %v1389
        %v1391 = vmul.f32 %v1384, 1.442695
        %v1392 = vpow.pop %v1391
        %v1393 = vsel %vm730, %v1386, 0.0
        %1394 = vadd.xlane.f32.xlu0 %v1393
        %v1395 = vpop.xlane.xlu0 %1394
        %v1396 = vsel %vm730, %v1388, 0.0
        %1397 = vadd.xlane.f32.xlu0 %v1396
        %v1398 = vpop.xlane.xlu0 %1397
        %v1399 = vsel %vm730, %v1390, 0.0
        %1400 = vadd.xlane.f32.xlu0 %v1399
        %v1401 = vpop.xlane.xlu0 %1400
        %v1402 = vsel %vm730, %v1392, 0.0
        %1403 = vadd.xlane.f32.xlu0 %v1402
        %v1404 = vpop.xlane.xlu0 %1403
        %v1405 = vrcp.pop %v1395
        %v1406 = vrcp.pop %v1398
        %v1407 = vrcp.pop %v1401
        %v1408 = vrcp.pop %v1404
        %v1409 = vmul.f32 %v1386, %v1405
        %v1410 = vmul.f32 %v1388, %v1406
        %v1411 = vmul.f32 %v1390, %v1407
        %v1412 = vmul.f32 %v1392, %v1408
        %v1413 = vpack.c.bf16 %v1410, %v1409
        %v1414 = vpack.c.bf16 %v1412, %v1411
        %1415 = vrot.lane.b32.xlu0 %v625, 64
        %v1416 = vpop.permute.xlu0 %1415
        %v1419 = vsel %vm730, %v1413, 0
        %1421 = vmatprep.subr.bf16.mxu0 0
        %1422 = vmatpush1.bf16.msra.mxu0 0
        %1423 = vmatprep.subr.bf16.mxu0 0
        %1424 = vmatpush1.bf16.msra.mxu0 0
        %1425 = vmatprep.subr.bf16.mxu0 0
        %1426 = vmatpush1.bf16.msra.mxu0 0
        %1427 = vmatprep.subr.bf16.mxu0 0
        %1428 = vmatpush1.bf16.msra.mxu0 0
        %1429 = vmatprep.subr.bf16.mxu0 0
        %1430 = vmatpush1.bf16.msra.mxu0 0
        %1431 = vmatprep.subr.bf16.mxu0 0
        %1432 = vmatpush1.bf16.msra.mxu0 0
        %1433 = vmatprep.subr.bf16.mxu0 0
        %1434 = vmatpush1.bf16.msra.mxu0 0
        %1435 = vmatprep.subr.bf16.mxu0 0
        %1436 = vmatpush1.bf16.msra.mxu0 %v1416
        %1437 = vmatprep.subr.bf16.mxu0 0
        %1438 = vmatpush2.bf16.msra.mxu0 0
        %1439 = vmatprep.subr.bf16.mxu0 0
        %1440 = vmatpush2.bf16.msra.mxu0 0
        %1441 = vmatprep.subr.bf16.mxu0 0
        %1442 = vmatpush2.bf16.msra.mxu0 0
        %1443 = vmatprep.subr.bf16.mxu0 0
        %1444 = vmatpush2.bf16.msra.mxu0 0
        %1445 = vmatprep.subr.bf16.mxu0 0
        %1446 = vmatpush2.bf16.msra.mxu0 0
        %1447 = vmatprep.subr.bf16.mxu0 0
        %1448 = vmatpush2.bf16.msra.mxu0 0
        %1449 = vmatprep.subr.bf16.mxu0 0
        %1450 = vmatpush2.bf16.msra.mxu0 0
        %1451 = vmatprep.subr.bf16.mxu0 0
        %1452 = vmatpush2.bf16.msra.mxu0 0
        %1453 = vmatprep.mubr.bf16.mxu0 0
        %1454 = vmatmul.mubr.bf16.gmra.mxu0 %v1419
        %v1455 = vpop.f32.mrf.mxu0
        %v1456 = vadd.f32 0.0, %v1455
        %v1457 = vpop.f32.mrf.mxu0
        %v1458 = vpop.f32.mrf.mxu0
        %v1459 = vadd.f32 0.0, %v1458
        %v1460 = vpop.f32.mrf.mxu0
        %1461 = vdwg.mxu0
        %1462 = vrot.lane.b32.xlu0 %v626, 64
        %v1463 = vpop.permute.xlu0 %1462
        %v1466 = vsel %vm730, %v1414, 0
        %1468 = vmatprep.subr.bf16.mxu0 0
        %1469 = vmatpush1.bf16.msra.mxu0 0
        %1470 = vmatprep.subr.bf16.mxu0 0
        %1471 = vmatpush1.bf16.msra.mxu0 0
        %1472 = vmatprep.subr.bf16.mxu0 0
        %1473 = vmatpush1.bf16.msra.mxu0 0
        %1474 = vmatprep.subr.bf16.mxu0 0
        %1475 = vmatpush1.bf16.msra.mxu0 0
        %1476 = vmatprep.subr.bf16.mxu0 0
        %1477 = vmatpush1.bf16.msra.mxu0 0
        %1478 = vmatprep.subr.bf16.mxu0 0
        %1479 = vmatpush1.bf16.msra.mxu0 0
        %1480 = vmatprep.subr.bf16.mxu0 0
        %1481 = vmatpush1.bf16.msra.mxu0 0
        %1482 = vmatprep.subr.bf16.mxu0 0
        %1483 = vmatpush1.bf16.msra.mxu0 %v1463
        %1484 = vmatprep.subr.bf16.mxu0 0
        %1485 = vmatpush2.bf16.msra.mxu0 0
        %1486 = vmatprep.subr.bf16.mxu0 0
        %1487 = vmatpush2.bf16.msra.mxu0 0
        %1488 = vmatprep.subr.bf16.mxu0 0
        %1489 = vmatpush2.bf16.msra.mxu0 0
        %1490 = vmatprep.subr.bf16.mxu0 0
        %1491 = vmatpush2.bf16.msra.mxu0 0
        %1492 = vmatprep.subr.bf16.mxu0 0
        %1493 = vmatpush2.bf16.msra.mxu0 0
        %1494 = vmatprep.subr.bf16.mxu0 0
        %1495 = vmatpush2.bf16.msra.mxu0 0
        %1496 = vmatprep.subr.bf16.mxu0 0
        %1497 = vmatpush2.bf16.msra.mxu0 0
        %1498 = vmatprep.subr.bf16.mxu0 0
        %1499 = vmatpush2.bf16.msra.mxu0 0
        %1500 = vmatprep.mubr.bf16.mxu0 0
        %1501 = vmatmul.mubr.bf16.gmra.mxu0 %v1466
        %v1502 = vpop.f32.mrf.mxu0
        %v1503 = vadd.f32 0.0, %v1502
        %v1504 = vpop.f32.mrf.mxu0
        %v1505 = vpop.f32.mrf.mxu0
        %v1506 = vadd.f32 0.0, %v1505
        %v1507 = vpop.f32.mrf.mxu0
        %1508 = vdwg.mxu0
        %v1509 = vpack.c.bf16 %v1459, %v1456
        %v1510 = vpack.c.bf16 %v1506, %v1503
        %v1515 = vunpack.c.l.b16 %v611
        %v1516 = vunpack.c.l.b16 %v612
        %v1517 = vunpack.c.l.b16 %v613
        %v1518 = vunpack.c.l.b16 %v614
        %v1519 = vpack.c.b16 %v1516, %v1515
        %v1520 = vpack.c.b16 %v1518, %v1517
        %v1524 = vsel %vm627, %v1509, 0
        %v1527 = vsel %vm627, %v1510, 0
        %1529 = vmatprep.subr.bf16.mxu0 0
        %1530 = vmatpush1.bf16.msra.mxu0 0
        %1531 = vmatprep.subr.bf16.mxu0 0
        %1532 = vmatpush1.bf16.msra.mxu0 0
        %1533 = vmatprep.subr.bf16.mxu0 0
        %1534 = vmatpush1.bf16.msra.mxu0 0
        %1535 = vmatprep.subr.bf16.mxu0 0
        %1536 = vmatpush1.bf16.msra.mxu0 0
        %1537 = vmatprep.subr.bf16.mxu0 0
        %1538 = vmatpush1.bf16.msra.mxu0 0
        %1539 = vmatprep.subr.bf16.mxu0 0
        %1540 = vmatpush1.bf16.msra.mxu0 0
        %1541 = vmatprep.subr.bf16.mxu0 0
        %1542 = vmatpush1.bf16.msra.mxu0 %v1520
        %1543 = vmatprep.subr.bf16.mxu0 0
        %1544 = vmatpush1.bf16.msra.mxu0 %v1519
        %1545 = vmatprep.subr.bf16.mxu0 0
        %1546 = vmatpush2.bf16.msra.mxu0 0
        %1547 = vmatprep.subr.bf16.mxu0 0
        %1548 = vmatpush2.bf16.msra.mxu0 0
        %1549 = vmatprep.subr.bf16.mxu0 0
        %1550 = vmatpush2.bf16.msra.mxu0 0
        %1551 = vmatprep.subr.bf16.mxu0 0
        %1552 = vmatpush2.bf16.msra.mxu0 0
        %1553 = vmatprep.subr.bf16.mxu0 0
        %1554 = vmatpush2.bf16.msra.mxu0 0
        %1555 = vmatprep.subr.bf16.mxu0 0
        %1556 = vmatpush2.bf16.msra.mxu0 0
        %1557 = vmatprep.subr.bf16.mxu0 0
        %1558 = vmatpush2.bf16.msra.mxu0 0
        %1559 = vmatprep.subr.bf16.mxu0 0
        %1560 = vmatpush2.bf16.msra.mxu0 0
        %1561 = vmatprep.mubr.bf16.mxu0 0
        %1562 = vmatmul.mubr.bf16.gmra.mxu0 %v1524
        %v1563 = vpop.f32.mrf.mxu0
        %v1564 = vadd.f32 0.0, %v1563
        %v1565 = vpop.f32.mrf.mxu0
        %v1566 = vpop.f32.mrf.mxu0
        %v1567 = vadd.f32 0.0, %v1566
        %v1568 = vpop.f32.mrf.mxu0
        %1569 = vmatprep.mubr.bf16.mxu0 0
        %1570 = vmatmul.mubr.bf16.gmra.mxu0 %v1527
        %v1571 = vpop.f32.mrf.mxu0
        %v1572 = vadd.f32 0.0, %v1571
        %v1573 = vpop.f32.mrf.mxu0
        %v1574 = vpop.f32.mrf.mxu0
        %v1575 = vadd.f32 0.0, %v1574
        %v1576 = vpop.f32.mrf.mxu0
        %1577 = vdwg.mxu0
        %v1578 = vadd.f32 %v1245, %v1564
        %v1579 = vadd.f32 %v1248, %v1567
        %v1580 = vadd.f32 %v1253, %v1572
        %v1581 = vadd.f32 %v1256, %v1575
        %1582 = vrot.lane.b32.xlu0 %v621, 32
        %v1583 = vpop.permute.xlu0 %1582
        %1584 = vrot.lane.b32.xlu0 %v623, 32
        %v1585 = vpop.permute.xlu0 %1584
        %v1587 = vsel %vm627, %v1583, 0
        %v1590 = vsel %vm627, %v1585, 0
        %1592 = vmatprep.subr.bf16.mxu0 0
        %1593 = vmatpush1.bf16.xpose.msra.mxu0 0
        %1594 = vmatprep.subr.bf16.mxu0 0
        %1595 = vmatpush1.bf16.xpose.msra.mxu0 0
        %1596 = vmatprep.subr.bf16.mxu0 0
        %1597 = vmatpush1.bf16.xpose.msra.mxu0 0
        %1598 = vmatprep.subr.bf16.mxu0 0
        %1599 = vmatpush1.bf16.xpose.msra.mxu0 0
        %1600 = vmatprep.subr.bf16.mxu0 0
        %1601 = vmatpush1.bf16.xpose.msra.mxu0 0
        %1602 = vmatprep.subr.bf16.mxu0 0
        %1603 = vmatpush1.bf16.xpose.msra.mxu0 0
        %1604 = vmatprep.subr.bf16.mxu0 0
        %1605 = vmatpush1.bf16.xpose.msra.mxu0 0
        %1606 = vmatprep.subr.bf16.mxu0 0
        %1607 = vmatpush1.bf16.xpose.msra.mxu0 %v1590
        %1608 = vmatprep.subr.bf16.mxu0 0
        %1609 = vmatpush2.bf16.xpose.msra.mxu0 0
        %1610 = vmatprep.subr.bf16.mxu0 0
        %1611 = vmatpush2.bf16.xpose.msra.mxu0 0
        %1612 = vmatprep.subr.bf16.mxu0 0
        %1613 = vmatpush2.bf16.xpose.msra.mxu0 0
        %1614 = vmatprep.subr.bf16.mxu0 0
        %1615 = vmatpush2.bf16.xpose.msra.mxu0 0
        %1616 = vmatprep.subr.bf16.mxu0 0
        %1617 = vmatpush2.bf16.xpose.msra.mxu0 0
        %1618 = vmatprep.subr.bf16.mxu0 0
        %1619 = vmatpush2.bf16.xpose.msra.mxu0 0
        %1620 = vmatprep.subr.bf16.mxu0 0
        %1621 = vmatpush2.bf16.xpose.msra.mxu0 0
        %1622 = vmatprep.subr.bf16.mxu0 0
        %1623 = vmatpush2.bf16.xpose.msra.mxu0 0
        %1624 = vmatprep.mubr.bf16.mxu0 0
        %1625 = vmatmul.mubr.bf16.gmra.mxu0 %v1587
        %v1626 = vpop.f32.mrf.mxu0
        %v1627 = vadd.f32 0.0, %v1626
        %v1628 = vpop.f32.mrf.mxu0
        %v1629 = vpop.f32.mrf.mxu0
        %v1630 = vadd.f32 0.0, %v1629
        %v1631 = vpop.f32.mrf.mxu0
        %1632 = vdwg.mxu0
        %1633 = vrot.lane.b32.xlu0 %v622, 32
        %v1634 = vpop.permute.xlu0 %1633
        %1635 = vrot.lane.b32.xlu0 %v624, 32
        %v1636 = vpop.permute.xlu0 %1635
        %v1638 = vsel %vm627, %v1634, 0
        %v1641 = vsel %vm627, %v1636, 0
        %1643 = vmatprep.subr.bf16.mxu0 0
        %1644 = vmatpush1.bf16.xpose.msra.mxu0 0
        %1645 = vmatprep.subr.bf16.mxu0 0
        %1646 = vmatpush1.bf16.xpose.msra.mxu0 0
        %1647 = vmatprep.subr.bf16.mxu0 0
        %1648 = vmatpush1.bf16.xpose.msra.mxu0 0
        %1649 = vmatprep.subr.bf16.mxu0 0
        %1650 = vmatpush1.bf16.xpose.msra.mxu0 0
        %1651 = vmatprep.subr.bf16.mxu0 0
        %1652 = vmatpush1.bf16.xpose.msra.mxu0 0
        %1653 = vmatprep.subr.bf16.mxu0 0
        %1654 = vmatpush1.bf16.xpose.msra.mxu0 0
        %1655 = vmatprep.subr.bf16.mxu0 0
        %1656 = vmatpush1.bf16.xpose.msra.mxu0 0
        %1657 = vmatprep.subr.bf16.mxu0 0
        %1658 = vmatpush1.bf16.xpose.msra.mxu0 %v1641
        %1659 = vmatprep.subr.bf16.mxu0 0
        %1660 = vmatpush2.bf16.xpose.msra.mxu0 0
        %1661 = vmatprep.subr.bf16.mxu0 0
        %1662 = vmatpush2.bf16.xpose.msra.mxu0 0
        %1663 = vmatprep.subr.bf16.mxu0 0
        %1664 = vmatpush2.bf16.xpose.msra.mxu0 0
        %1665 = vmatprep.subr.bf16.mxu0 0
        %1666 = vmatpush2.bf16.xpose.msra.mxu0 0
        %1667 = vmatprep.subr.bf16.mxu0 0
        %1668 = vmatpush2.bf16.xpose.msra.mxu0 0
        %1669 = vmatprep.subr.bf16.mxu0 0
        %1670 = vmatpush2.bf16.xpose.msra.mxu0 0
        %1671 = vmatprep.subr.bf16.mxu0 0
        %1672 = vmatpush2.bf16.xpose.msra.mxu0 0
        %1673 = vmatprep.subr.bf16.mxu0 0
        %1674 = vmatpush2.bf16.xpose.msra.mxu0 0
        %1675 = vmatprep.mubr.bf16.mxu0 0
        %1676 = vmatmul.mubr.bf16.gmra.mxu0 %v1638
        %v1677 = vpop.f32.mrf.mxu0
        %v1678 = vadd.f32 0.0, %v1677
        %v1679 = vpop.f32.mrf.mxu0
        %v1680 = vpop.f32.mrf.mxu0
        %v1681 = vadd.f32 0.0, %v1680
        %v1682 = vpop.f32.mrf.mxu0
        %1683 = vdwg.mxu0
        %v1684 = vmul.f32 %v1627, 0.17677669
        %v1685 = vmul.f32 %v1630, 0.17677669
        %v1686 = vmul.f32 %v1678, 0.17677669
        %v1687 = vmul.f32 %v1681, 0.17677669
        %v1688 = vadd.f32 %v1684, %v619
        %v1689 = vadd.f32 %v1685, %v620
        %v1690 = vadd.f32 %v1686, %v619
        %v1691 = vadd.f32 %v1687, %v620
        %v1692 = vsel %vm730, %v1688, -inf
        %1693 = vmax.xlane.f32.xlu0 %v1692
        %v1694 = vpop.xlane.xlu0 %1693
        %v1695 = vsel %vm730, %v1689, -inf
        %1696 = vmax.xlane.f32.xlu0 %v1695
        %v1697 = vpop.xlane.xlu0 %1696
        %v1698 = vsel %vm730, %v1690, -inf
        %1699 = vmax.xlane.f32.xlu0 %v1698
        %v1700 = vpop.xlane.xlu0 %1699
        %v1701 = vsel %vm730, %v1691, -inf
        %1702 = vmax.xlane.f32.xlu0 %v1701
        %v1703 = vpop.xlane.xlu0 %1702
        %v1704 = vsub.f32 %v1688, %v1694
        %v1705 = vsub.f32 %v1689, %v1697
        %v1706 = vsub.f32 %v1690, %v1700
        %v1707 = vsub.f32 %v1691, %v1703
        %v1708 = vmul.f32 %v1704, 1.442695
        %v1709 = vpow.pop %v1708
        %v1710 = vmul.f32 %v1705, 1.442695
        %v1711 = vpow.pop %v1710
        %v1712 = vmul.f32 %v1706, 1.442695
        %v1713 = vpow.pop %v1712
        %v1714 = vmul.f32 %v1707, 1.442695
        %v1715 = vpow.pop %v1714
        %v1716 = vsel %vm730, %v1709, 0.0
        %1717 = vadd.xlane.f32.xlu0 %v1716
        %v1718 = vpop.xlane.xlu0 %1717
        %v1719 = vsel %vm730, %v1711, 0.0
        %1720 = vadd.xlane.f32.xlu0 %v1719
        %v1721 = vpop.xlane.xlu0 %1720
        %v1722 = vsel %vm730, %v1713, 0.0
        %1723 = vadd.xlane.f32.xlu0 %v1722
        %v1724 = vpop.xlane.xlu0 %1723
        %v1725 = vsel %vm730, %v1715, 0.0
        %1726 = vadd.xlane.f32.xlu0 %v1725
        %v1727 = vpop.xlane.xlu0 %1726
        %v1728 = vrcp.pop %v1718
        %v1729 = vrcp.pop %v1721
        %v1730 = vrcp.pop %v1724
        %v1731 = vrcp.pop %v1727
        %v1732 = vmul.f32 %v1709, %v1728
        %v1733 = vmul.f32 %v1711, %v1729
        %v1734 = vmul.f32 %v1713, %v1730
        %v1735 = vmul.f32 %v1715, %v1731
        %v1736 = vpack.c.bf16 %v1733, %v1732
        %v1737 = vpack.c.bf16 %v1735, %v1734
        %1738 = vrot.lane.b32.xlu0 %v625, 32
        %v1739 = vpop.permute.xlu0 %1738
        %v1742 = vsel %vm730, %v1736, 0
        %1744 = vmatprep.subr.bf16.mxu0 0
        %1745 = vmatpush1.bf16.msra.mxu0 0
        %1746 = vmatprep.subr.bf16.mxu0 0
        %1747 = vmatpush1.bf16.msra.mxu0 0
        %1748 = vmatprep.subr.bf16.mxu0 0
        %1749 = vmatpush1.bf16.msra.mxu0 0
        %1750 = vmatprep.subr.bf16.mxu0 0
        %1751 = vmatpush1.bf16.msra.mxu0 0
        %1752 = vmatprep.subr.bf16.mxu0 0
        %1753 = vmatpush1.bf16.msra.mxu0 0
        %1754 = vmatprep.subr.bf16.mxu0 0
        %1755 = vmatpush1.bf16.msra.mxu0 0
        %1756 = vmatprep.subr.bf16.mxu0 0
        %1757 = vmatpush1.bf16.msra.mxu0 0
        %1758 = vmatprep.subr.bf16.mxu0 0
        %1759 = vmatpush1.bf16.msra.mxu0 %v1739
        %1760 = vmatprep.subr.bf16.mxu0 0
        %1761 = vmatpush2.bf16.msra.mxu0 0
        %1762 = vmatprep.subr.bf16.mxu0 0
        %1763 = vmatpush2.bf16.msra.mxu0 0
        %1764 = vmatprep.subr.bf16.mxu0 0
        %1765 = vmatpush2.bf16.msra.mxu0 0
        %1766 = vmatprep.subr.bf16.mxu0 0
        %1767 = vmatpush2.bf16.msra.mxu0 0
        %1768 = vmatprep.subr.bf16.mxu0 0
        %1769 = vmatpush2.bf16.msra.mxu0 0
        %1770 = vmatprep.subr.bf16.mxu0 0
        %1771 = vmatpush2.bf16.msra.mxu0 0
        %1772 = vmatprep.subr.bf16.mxu0 0
        %1773 = vmatpush2.bf16.msra.mxu0 0
        %1774 = vmatprep.subr.bf16.mxu0 0
        %1775 = vmatpush2.bf16.msra.mxu0 0
        %1776 = vmatprep.mubr.bf16.mxu0 0
        %1777 = vmatmul.mubr.bf16.gmra.mxu0 %v1742
        %v1778 = vpop.f32.mrf.mxu0
        %v1779 = vadd.f32 0.0, %v1778
        %v1780 = vpop.f32.mrf.mxu0
        %v1781 = vpop.f32.mrf.mxu0
        %v1782 = vadd.f32 0.0, %v1781
        %v1783 = vpop.f32.mrf.mxu0
        %1784 = vdwg.mxu0
        %1785 = vrot.lane.b32.xlu0 %v626, 32
        %v1786 = vpop.permute.xlu0 %1785
        %v1789 = vsel %vm730, %v1737, 0
        %1791 = vmatprep.subr.bf16.mxu0 0
        %1792 = vmatpush1.bf16.msra.mxu0 0
        %1793 = vmatprep.subr.bf16.mxu0 0
        %1794 = vmatpush1.bf16.msra.mxu0 0
        %1795 = vmatprep.subr.bf16.mxu0 0
        %1796 = vmatpush1.bf16.msra.mxu0 0
        %1797 = vmatprep.subr.bf16.mxu0 0
        %1798 = vmatpush1.bf16.msra.mxu0 0
        %1799 = vmatprep.subr.bf16.mxu0 0
        %1800 = vmatpush1.bf16.msra.mxu0 0
        %1801 = vmatprep.subr.bf16.mxu0 0
        %1802 = vmatpush1.bf16.msra.mxu0 0
        %1803 = vmatprep.subr.bf16.mxu0 0
        %1804 = vmatpush1.bf16.msra.mxu0 0
        %1805 = vmatprep.subr.bf16.mxu0 0
        %1806 = vmatpush1.bf16.msra.mxu0 %v1786
        %1807 = vmatprep.subr.bf16.mxu0 0
        %1808 = vmatpush2.bf16.msra.mxu0 0
        %1809 = vmatprep.subr.bf16.mxu0 0
        %1810 = vmatpush2.bf16.msra.mxu0 0
        %1811 = vmatprep.subr.bf16.mxu0 0
        %1812 = vmatpush2.bf16.msra.mxu0 0
        %1813 = vmatprep.subr.bf16.mxu0 0
        %1814 = vmatpush2.bf16.msra.mxu0 0
        %1815 = vmatprep.subr.bf16.mxu0 0
        %1816 = vmatpush2.bf16.msra.mxu0 0
        %1817 = vmatprep.subr.bf16.mxu0 0
        %1818 = vmatpush2.bf16.msra.mxu0 0
        %1819 = vmatprep.subr.bf16.mxu0 0
        %1820 = vmatpush2.bf16.msra.mxu0 0
        %1821 = vmatprep.subr.bf16.mxu0 0
        %1822 = vmatpush2.bf16.msra.mxu0 0
        %1823 = vmatprep.mubr.bf16.mxu0 0
        %1824 = vmatmul.mubr.bf16.gmra.mxu0 %v1789
        %v1825 = vpop.f32.mrf.mxu0
        %v1826 = vadd.f32 0.0, %v1825
        %v1827 = vpop.f32.mrf.mxu0
        %v1828 = vpop.f32.mrf.mxu0
        %v1829 = vadd.f32 0.0, %v1828
        %v1830 = vpop.f32.mrf.mxu0
        %1831 = vdwg.mxu0
        %v1832 = vpack.c.bf16 %v1782, %v1779
        %v1833 = vpack.c.bf16 %v1829, %v1826
        %v1838 = vunpack.c.l.b16 %v615
        %v1839 = vunpack.c.l.b16 %v616
        %v1840 = vunpack.c.l.b16 %v617
        %v1841 = vunpack.c.l.b16 %v618
        %v1842 = vpack.c.b16 %v1839, %v1838
        %v1843 = vpack.c.b16 %v1841, %v1840
        %v1847 = vsel %vm627, %v1832, 0
        %v1850 = vsel %vm627, %v1833, 0
        %1852 = vmatprep.subr.bf16.mxu0 0
        %1853 = vmatpush1.bf16.msra.mxu0 0
        %1854 = vmatprep.subr.bf16.mxu0 0
        %1855 = vmatpush1.bf16.msra.mxu0 0
        %1856 = vmatprep.subr.bf16.mxu0 0
        %1857 = vmatpush1.bf16.msra.mxu0 0
        %1858 = vmatprep.subr.bf16.mxu0 0
        %1859 = vmatpush1.bf16.msra.mxu0 0
        %1860 = vmatprep.subr.bf16.mxu0 0
        %1861 = vmatpush1.bf16.msra.mxu0 0
        %1862 = vmatprep.subr.bf16.mxu0 0
        %1863 = vmatpush1.bf16.msra.mxu0 0
        %1864 = vmatprep.subr.bf16.mxu0 0
        %1865 = vmatpush1.bf16.msra.mxu0 %v1843
        %1866 = vmatprep.subr.bf16.mxu0 0
        %1867 = vmatpush1.bf16.msra.mxu0 %v1842
        %1868 = vmatprep.subr.bf16.mxu0 0
        %1869 = vmatpush2.bf16.msra.mxu0 0
        %1870 = vmatprep.subr.bf16.mxu0 0
        %1871 = vmatpush2.bf16.msra.mxu0 0
        %1872 = vmatprep.subr.bf16.mxu0 0
        %1873 = vmatpush2.bf16.msra.mxu0 0
        %1874 = vmatprep.subr.bf16.mxu0 0
        %1875 = vmatpush2.bf16.msra.mxu0 0
        %1876 = vmatprep.subr.bf16.mxu0 0
        %1877 = vmatpush2.bf16.msra.mxu0 0
        %1878 = vmatprep.subr.bf16.mxu0 0
        %1879 = vmatpush2.bf16.msra.mxu0 0
        %1880 = vmatprep.subr.bf16.mxu0 0
        %1881 = vmatpush2.bf16.msra.mxu0 0
        %1882 = vmatprep.subr.bf16.mxu0 0
        %1883 = vmatpush2.bf16.msra.mxu0 0
        %1884 = vmatprep.mubr.bf16.mxu0 0
        %1885 = vmatmul.mubr.bf16.gmra.mxu0 %v1847
        %v1886 = vpop.f32.mrf.mxu0
        %v1887 = vadd.f32 0.0, %v1886
        %v1888 = vpop.f32.mrf.mxu0
        %v1889 = vpop.f32.mrf.mxu0
        %v1890 = vadd.f32 0.0, %v1889
        %v1891 = vpop.f32.mrf.mxu0
        %1892 = vmatprep.mubr.bf16.mxu0 0
        %1893 = vmatmul.mubr.bf16.gmra.mxu0 %v1850
        %v1894 = vpop.f32.mrf.mxu0
        %v1895 = vadd.f32 0.0, %v1894
        %v1896 = vpop.f32.mrf.mxu0
        %v1897 = vpop.f32.mrf.mxu0
        %v1898 = vadd.f32 0.0, %v1897
        %v1899 = vpop.f32.mrf.mxu0
        %1900 = vdwg.mxu0
        %v1901 = vadd.f32 %v1578, %v1887
        %v1902 = vadd.f32 %v1579, %v1890
        %v1903 = vadd.f32 %v1580, %v1895
        %v1904 = vadd.f32 %v1581, %v1898
        %v1905 = vld [vmem:[%s4] sm:$0x1]
        %v1907 = vlaneseq
        %v1908 = vshrl.u32 %v1907, 7
        %v1909 = vsub.s32 0, %v1908
        %v1910 = vrot.slane %v1905, %v1909
        %v1912 = vadd.f32 %v1901, %v1910
        %v1913 = vadd.f32 %v1902, %v1910
        %v1914 = vadd.f32 %v1903, %v1910
        %v1915 = vadd.f32 %v1904, %v1910
        %1916 = vst [vmem:[%s314] sm:$0xff] %v1912
        %1917 = vst [vmem:[%s314 + $0x8] sm:$0xff] %v1913
        %1918 = vst [vmem:[%s314 + $0x10] sm:$0xff] %v1914
        %1919 = vst [vmem:[%s314 + $0x18] sm:$0xff] %v1915
        %s1920 = sand.u32 %s164, 1
        %s1921 = scalar_lea.sflag [#allocation4], %s1920
        %s1922 = sand.u32 %s164, 1
        %s1923 = smul.addr %s1922, 32
        %s1924 = scalar_lea.vmem [#allocation10], %s1923
        // Predicated region
        $region61: #{tpu_custom_call.1} parent=43 // pred_check
          %p1925 = pneg %p174
        $region62: #{tpu_custom_call.1} parent=43 // pred_check_branch
          %1927 = sbr.rel (%p1925) target = $region64
        $region63: #{tpu_custom_call.1} parent=43 // pred_region
          %s1928 = smul.u32 2, %s25
          %s1930 = ssub.s32 512, 512
          %1931 = vsyncadd %s1921, %s1930
          %s1932 = smul.addr %s1928, 2
          %s1933 = smul.addr %s1932, 128
          %s1934 = scalar_lea.hbm %s6, %s1933
          %s1935 = sshll.u32 %s1924, 4
          %s1936 = int_to_ptr.vmem [resolvable:$true] %s1935
          %1941 = dma.vmem_to_hbm [thread:$0]  %s1936, 512, %s1934, %s1921, 128, 128, 8
        $region64: #{tpu_custom_call.1} parent=43 // pred_fallthru
          _
      $region44: #{tpu_custom_call.1} parent=5 // pred_fallthru
        _
      %p1942 = scmp.le.s32.totalorder 2, %s20
      // Predicated region
      $region65: #{tpu_custom_call.1} parent=5 // pred_check
        %p1943 = pneg %p1942
      $region66: #{tpu_custom_call.1} parent=5 // pred_check_branch
        %1945 = sbr.rel (%p1943) target = $region68
      $region67: #{tpu_custom_call.1} parent=5 // pred_region
        %s1946 = ssub.s32 %s20, 2
        // Predicated region
        $region69: #{tpu_custom_call.1} parent=67 // pred_check
          %p1947 = pneg %p180
        $region70: #{tpu_custom_call.1} parent=67 // pred_check_branch
          %1949 = sbr.rel (%p1947) target = $region72
        $region71: #{tpu_custom_call.1} parent=67 // pred_region
          %s1950 = sand.u32 %s165, 1
          %s1951 = scalar_lea.sflag [#allocation4], %s1950
          %s1952 = sand.u32 %s165, 1
          %s1953 = smul.addr %s1952, 32
          %s1954 = scalar_lea.vmem [#allocation10], %s1953
          %1955 = dma.done %s1951, 512
        $region72: #{tpu_custom_call.1} parent=67 // pred_fallthru
          _
      $region68: #{tpu_custom_call.1} parent=5 // pred_fallthru
        _
    $region6: #{tpu_custom_call.1} parent=1 // loop_footer
      %s24 = sadd.s32 1, %s20
    $region7: #{tpu_custom_call.1} parent=1 // loop_footer_branch
      %19 = sbr.rel target = $region3
    $region8: #{tpu_custom_call.1} parent=1 // loop_exit
      _
    %1956 = vsyncpa [#allocation3], 1
    %s1957 = scalar_lea.sflag [#allocation3], 1
    %1958 = vsyncpa %s1957, 1
    %1959 = vsyncpa [#allocation6], 1
    %1960 = vsyncpa [#allocation9], 1
    %1961 = vsyncpa [#allocation4], 1
    %s1962 = scalar_lea.sflag [#allocation4], 1
    %1963 = vsyncpa %s1962, 1

</llo_original>
